<compile_context>
chip_gen: v7x
topology: tpu7x:2x2x1
jax: 0.10.0
libtpu: 0.0.40
codegen_flags: <defaults>
</compile_context>

<pallas_src>
import jax
import jax.numpy as jnp
from jax import lax
from jax.experimental import pallas as pl
from jax.experimental.pallas import tpu as pltpu


_LANE = 128      # lane width: keep gate slices / output stores lane-dense
_SUBLANE = 8     # sublane width: keep batch rows sublane-dense / 8-aligned


def _round_up(x, m):
    return (x + m - 1) // m * m


# ------------------------------- Pallas kernel -------------------------------

def _make_bigru_kernel(*, t_blk, Bp, Hp, T, pad, unroll):
    """Fused (input projection + GRU recurrence) kernel for one (direction, time block).

    Grid: (direction d in {0 fwd, 1 bwd}, time block i).  The hidden state is a
    (Bp, Hp) VMEM scratch carried across time blocks (zeroed at i == 0); the
    block's gate inputs are computed with one MXU matmul into a VMEM scratch,
    then t_blk serial GRU steps run, each with a (Bp,Hp)@(Hp,3Hp) matmul.
    """

    def kernel(x_ref, w_in_ref, b_in_ref, w_hh_ref, b_hn_ref,
               out_ref, h_ref, gi_ref):
        d = pl.program_id(0)          # 0 = forward, 1 = backward
        i = pl.program_id(1)          # time-block index (processing order)

        @pl.when(i == 0)
        def _():
            h_ref[...] = jnp.zeros_like(h_ref)

        # Fused input projection for the whole time block (one MXU matmul):
        # removes the (T, B, 6H) gate-input round trip through HBM entirely.
        gi_ref[...] = (
            jnp.dot(x_ref[...], w_in_ref[...],
                    preferred_element_type=jnp.float32)
            + b_in_ref[...])

        whh = w_hh_ref[...]                               # (Hp, 3Hp), loop-invariant
        bhn = jnp.broadcast_to(b_hn_ref[...], (Bp, Hp))   # hoisted out of the loop

        def step(j, h):
            # Local time row: j for forward, t_blk-1-j for backward (the
            # block-level reversal is done by the BlockSpec index_map).
            idx = j + d * (t_blk - 1 - 2 * j)
            row = pl.multiple_of(idx * Bp, Bp)
            gi = gi_ref[pl.ds(row, Bp), :]                               # (Bp, 3Hp)
            gh = jnp.dot(h, whh, preferred_element_type=jnp.float32)    # (Bp, 3Hp)
            r = jax.nn.sigmoid(gi[:, :Hp] + gh[:, :Hp])
            z = jax.nn.sigmoid(gi[:, Hp:2 * Hp] + gh[:, Hp:2 * Hp])
            n = jnp.tanh(gi[:, 2 * Hp:] + r * (gh[:, 2 * Hp:] + bhn))
            h_new = (1.0 - z) * n + z * h
            if pad:
                # Padded timesteps (time >= T) must not disturb the carried
                # state; only the backward direction meets them mid-sequence.
                p = i * t_blk + j
                valid = jnp.logical_or(d == 0, p >= pad)
                h_new = jnp.where(valid, h_new, h)
            out_ref[idx] = h_new.astype(out_ref.dtype)
            return h_new

        h_ref[...] = lax.fori_loop(0, t_blk, step, h_ref[...], unroll=unroll)

    return kernel


# ------------------------------- VMEM sizing -------------------------------

def _vmem_bytes(t_blk, Bp, E, Hp):
    """Rough per-kernel VMEM estimate (f32, default double-buffered blocks)."""
    f = 4
    G = 3 * Hp
    blocks = 2 * t_blk * Bp * E + 2 * t_blk * Bp * Hp          # x / out (x2 buffers)
    weights = 2 * (E * G + Hp * G + G + Hp)                    # w_in, w_hh, biases
    scratch = t_blk * Bp * G + Bp * Hp                         # gi block + hidden
    return (blocks + weights + scratch) * f


def _vmem_budget_bytes():
    """Per-generation VMEM budget used to size the time block."""
    try:
        kind = jax.devices()[0].device_kind.lower()
    except Exception:
        return 24 << 20
    if "v5 lite" in kind or "v5e" in kind or "v5litepod" in kind:
        return 12 << 20            # v5e: 16 MiB default scoped VMEM
    if "v6" in kind:
        return 48 << 20            # v6e: 128 MiB physical VMEM
    if "v7" in kind:
        return 24 << 20            # v7x: 64 MiB physical VMEM
    return 24 << 20


def _pick_time_block(T, Bp, E, Hp, budget, cap=64):
    """Largest power-of-two time block (>= 8) fitting the VMEM budget."""
    t = 8
    while t * 2 <= cap and t < T and _vmem_bytes(t * 2, Bp, E, Hp) <= budget:
        t *= 2
    return t


# ------------------------------- pallas_call wrapper -------------------------------

def _bigru_pallas(x2d, w_in, b_in, w_hh, b_hn, *, T, Tp, Bp, Hp, t_blk):
    E = x2d.shape[1]
    G = 3 * Hp
    nb = Tp // t_blk
    pad = Tp - T
    unroll = min(8, t_blk)         # cap unroll: avoid vreg spills at large t_blk

    def tmap(d, i):
        # forward (d=0): time block i; backward (d=1): time block nb-1-i.
        return i * (1 - d) + (nb - 1 - i) * d

    kernel = _make_bigru_kernel(t_blk=t_blk, Bp=Bp, Hp=Hp, T=T, pad=pad,
                                unroll=unroll)

    need = _vmem_bytes(t_blk, Bp, E, Hp)
    vmem_limit = int(min(max(2 * need, 24 << 20), 96 << 20))

    # NOTE: the weight/bias blocks only change with the (outer) direction axis;
    # pipeline_mode=pl.Buffered(1) on those specs would reclaim their second
    # VMEM buffer at production sizes (left at the default here).
    return pl.pallas_call(
        kernel,
        out_shape=jax.ShapeDtypeStruct((Tp, Bp, 2 * Hp), jnp.float32),
        grid_spec=pltpu.PrefetchScalarGridSpec(
            num_scalar_prefetch=0,
            grid=(2, nb),                                 # (direction, time block)
            in_specs=[
                pl.BlockSpec((t_blk * Bp, E), lambda d, i: (tmap(d, i), 0)),
                pl.BlockSpec((None, E, G), lambda d, i: (d, 0, 0)),
                pl.BlockSpec((None, 1, G), lambda d, i: (d, 0, 0)),
                pl.BlockSpec((None, Hp, G), lambda d, i: (d, 0, 0)),
                pl.BlockSpec((None, 1, Hp), lambda d, i: (d, 0, 0)),
            ],
            out_specs=pl.BlockSpec((t_blk, Bp, Hp),
                                   lambda d, i: (tmap(d, i), 0, d)),
            scratch_shapes=[
                pltpu.VMEM((Bp, Hp), jnp.float32),            # hidden-state carry
                pltpu.VMEM((t_blk * Bp, G), jnp.float32),     # block gate inputs
            ],
        ),
        compiler_params=pltpu.CompilerParams(
            dimension_semantics=("parallel", "arbitrary"),    # dir x time(serial)
            vmem_limit_bytes=vmem_limit),
    )(x2d, w_in, b_in, w_hh, b_hn)


# ------------------------------- weight packing -------------------------------

def _pack_direction(w_ih, w_hh, b_ih, b_hh, Hp):
    """PyTorch GRU weights (one direction) -> padded, fused matrices.

    Returns:
      w_in : (E, 3Hp)  x-projection, gate columns [r | z | n], each Hp wide.
      b_in : (1, 3Hp)  b_ih with b_hh folded in for r/z (n's b_hh stays separate
                       because PyTorch multiplies it by r).
      w_hh : (Hp, 3Hp) h-projection (transposed for h @ W), zero-padded.
      b_hn : (1, Hp)   b_hh of the n gate.
    """
    H = w_hh.shape[1]
    pad_h = Hp - H

    wi = [w_ih[g * H:(g + 1) * H] for g in range(3)]   # (H, E) each, order [r, z, n]
    wh = [w_hh[g * H:(g + 1) * H] for g in range(3)]   # (H, H) each
    bi = [b_ih[g * H:(g + 1) * H] for g in range(3)]
    bh = [b_hh[g * H:(g + 1) * H] for g in range(3)]

    w_in = jnp.concatenate(
        [jnp.pad(w.T, ((0, 0), (0, pad_h))) for w in wi], axis=1)        # (E, 3Hp)
    b_in = jnp.concatenate(
        [jnp.pad(bi[0] + bh[0], (0, pad_h)),
         jnp.pad(bi[1] + bh[1], (0, pad_h)),
         jnp.pad(bi[2], (0, pad_h))]).reshape(1, 3 * Hp)
    w_hh_p = jnp.concatenate(
        [jnp.pad(w.T, ((0, pad_h), (0, pad_h))) for w in wh], axis=1)    # (Hp, 3Hp)
    b_hn = jnp.pad(bh[2], (0, pad_h)).reshape(1, Hp)
    return w_in, b_in, w_hh_p, b_hn


def _pack_bigru_weights(params, Hp):
    fwd = _pack_direction(params["w_ih_f"], params["w_hh_f"],
                          params["b_ih_f"], params["b_hh_f"], Hp)
    bwd = _pack_direction(params["w_ih_b"], params["w_hh_b"],
                          params["b_ih_b"], params["b_hh_b"], Hp)
    w_in = jnp.stack([fwd[0], bwd[0]])    # (2, E, 3Hp)
    b_in = jnp.stack([fwd[1], bwd[1]])    # (2, 1, 3Hp)
    w_hh = jnp.stack([fwd[2], bwd[2]])    # (2, Hp, 3Hp)
    b_hn = jnp.stack([fwd[3], bwd[3]])    # (2, 1, Hp)
    return w_in, b_in, w_hh, b_hn


# ------------------------------- forward -------------------------------

def bigru_forward(src, params):
    """src: (B, T) int32 token ids -> (out (T, B, 2H), hidden (2, B, H))."""
    H = params["w_hh_f"].shape[1]
    E = params["embedding"].shape[1]

    emb = params["embedding"][src]              # (B, T, E) embedding gather (glue)
    x = jnp.transpose(emb, (1, 0, 2))           # (T, B, E)  == x.transpose(0, 1)
    T, B, _ = x.shape

    Hp = _round_up(H, _LANE)                    # lane-dense gate slices / stores
    Bp = _round_up(B, _SUBLANE)                 # sublane-dense batch rows
    budget = _vmem_budget_bytes()
    t_blk = _pick_time_block(T, Bp, E, Hp, budget)
    Tp = pl.cdiv(T, t_blk) * t_blk              # pad T instead of shrinking t_blk

    w_in, b_in, w_hh, b_hn = _pack_bigru_weights(params, Hp)

    if (Tp, Bp) != (T, B):
        x = jnp.pad(x, ((0, Tp - T), (0, Bp - B), (0, 0)))
    x2d = x.reshape(Tp * Bp, E)                 # time-major rows for the kernel

    out_pad = _bigru_pallas(x2d, w_in, b_in, w_hh, b_hn,
                            T=T, Tp=Tp, Bp=Bp, Hp=Hp, t_blk=t_blk)
    # out_pad: (Tp, Bp, 2*Hp), [forward | backward] halves, natural time order.
    if (Tp, Bp, Hp) == (T, B, H):
        out = out_pad                           # fully aligned: no extra copy
    else:
        out = jnp.concatenate(
            [out_pad[:T, :B, :H], out_pad[:T, :B, Hp:Hp + H]], axis=-1)
    hidden = jnp.stack([out_pad[T - 1, :B, :H], out_pad[0, :B, Hp:Hp + H]], axis=0)
    # TODO(synk): self.fc / self.dropout are declared in the reference __init__
    # but never applied in forward(), so they are initialized but unused here too.
    return out, hidden


# ------------------------------- params & reference -------------------------------

def init_bigru_params(key, input_dim, emb_dim, hidden_dim, out_dim):
    ks = jax.random.split(key, 12)
    bound = 1.0 / jnp.sqrt(jnp.float32(hidden_dim))
    u = lambda k, shape: jax.random.uniform(
        k, shape, jnp.float32, minval=-bound, maxval=bound)
    return {
        "embedding": jax.random.normal(ks[0], (input_dim, emb_dim), jnp.float32),
        # forward direction
        "w_ih_f": u(ks[1], (3 * hidden_dim, emb_dim)),
        "w_hh_f": u(ks[2], (3 * hidden_dim, hidden_dim)),
        "b_ih_f": u(ks[3], (3 * hidden_dim,)),
        "b_hh_f": u(ks[4], (3 * hidden_dim,)),
        # backward direction
        "w_ih_b": u(ks[5], (3 * hidden_dim, emb_dim)),
        "w_hh_b": u(ks[6], (3 * hidden_dim, hidden_dim)),
        "b_ih_b": u(ks[7], (3 * hidden_dim,)),
        "b_hh_b": u(ks[8], (3 * hidden_dim,)),
        # fc declared in __init__ but unused in forward()
        "fc_w": u(ks[9], (out_dim, 2 * hidden_dim)),
        "fc_b": u(ks[10], (out_dim,)),
    }


def _gru_ref(x, w_ih, w_hh, b_ih, b_hh, reverse):
    T, B, _ = x.shape
    H = w_hh.shape[1]

    def step(h, xt):
        gi = xt @ w_ih.T + b_ih
        gh = h @ w_hh.T + b_hh
        r = jax.nn.sigmoid(gi[:, :H] + gh[:, :H])
        z = jax.nn.sigmoid(gi[:, H:2 * H] + gh[:, H:2 * H])
        n = jnp.tanh(gi[:, 2 * H:] + r * gh[:, 2 * H:])
        hn = (1.0 - z) * n + z * h
        return hn, hn

    xs = x[::-1] if reverse else x
    _, outs = jax.lax.scan(step, jnp.zeros((B, H), jnp.float32), xs)
    return outs[::-1] if reverse else outs


if __name__ == "__main__":
    INPUT_DIM, EMB_DIM, HID_DIM, OUT_DIM, DROPOUT = 50, 32, 32, 4, 0.1
    B, T = 2, 8

    key = jax.random.PRNGKey(0)
    k_params, k_src = jax.random.split(key)
    params = init_bigru_params(k_params, INPUT_DIM, EMB_DIM, HID_DIM, OUT_DIM)

    def reference(src):
        x_ref = jnp.transpose(params["embedding"][src], (1, 0, 2))
        ref_f = _gru_ref(x_ref, params["w_ih_f"], params["w_hh_f"],
                         params["b_ih_f"], params["b_hh_f"], reverse=False)
        ref_b = _gru_ref(x_ref, params["w_ih_b"], params["w_hh_b"],
                         params["b_ih_b"], params["b_hh_b"], reverse=True)
        return (jnp.concatenate([ref_f, ref_b], axis=-1),
                jnp.stack([ref_f[-1], ref_b[0]], axis=0))

    # Test both an aligned sequence length and one needing tail padding.
    for t_len in (T, 7):
        src = jax.random.randint(k_src, (B, t_len), 0, INPUT_DIM, dtype=jnp.int32)
        out, hidden = jax.block_until_ready(bigru_forward(src, params))
        assert out.shape == (t_len, B, 2 * HID_DIM)
        assert hidden.shape == (2, B, HID_DIM)

        ref_out, ref_hidden = reference(src)
        assert jnp.allclose(out, ref_out, atol=1e-4, rtol=1e-4)
        assert jnp.allclose(hidden, ref_hidden, atol=1e-4, rtol=1e-4)

    print("KERNEL_OK")
</pallas_src>

<mosaic_0001>
module attributes {stable_mosaic.version = 11 : i64} {
  func.func @kernel(%arg0: i32, %arg1: i32, %arg2: memref<64x32xf32, #tpu.memory_space<vmem>>, %arg3: memref<1x32x384xf32, #tpu.memory_space<vmem>>, %arg4: memref<1x1x384xf32, #tpu.memory_space<vmem>>, %arg5: memref<1x128x384xf32, #tpu.memory_space<vmem>>, %arg6: memref<1x1x128xf32, #tpu.memory_space<vmem>>, %arg7: memref<8x8x128xf32, #tpu.memory_space<vmem>>, %arg8: memref<8x128xf32, #tpu.memory_space<vmem>>, %arg9: memref<64x384xf32, #tpu.memory_space<vmem>>) attributes {dimension_semantics = [#tpu.dimension_semantics<parallel>, #tpu.dimension_semantics<arbitrary>], iteration_bounds = array<i64: 2, 1>, scalar_prefetch = 0 : i64, scratch_operands = 2 : i64, tpu.core_type = #tpu.core_type<tc>, window_params = [{transform_indices = @transform_0, window_bounds = array<i64: 64, 32>}, {transform_indices = @transform_1, window_bounds = array<i64: 1, 32, 384>}, {transform_indices = @transform_2, window_bounds = array<i64: 1, 1, 384>}, {transform_indices = @transform_3, window_bounds = array<i64: 1, 128, 384>}, {transform_indices = @transform_4, window_bounds = array<i64: 1, 1, 128>}, {transform_indices = @transform_5, window_bounds = array<i64: 8, 8, 128>}]} {
    %c0_i32 = arith.constant 0 : i32
    %0 = arith.cmpi eq, %arg1, %c0_i32 : i32
    %1 = arith.extui %0 : i1 to i32
    %c0_i32_0 = arith.constant 0 : i32
    %2 = arith.cmpi ne, %1, %c0_i32_0 : i32
    scf.if %2 {
      %cst_101 = arith.constant 0.000000e+00 : f32
      %340 = vector.broadcast %cst_101 : f32 to vector<8x128xf32>
      %c0_102 = arith.constant 0 : index
      %c0_103 = arith.constant 0 : index
      %341 = vector.load %arg8[%c0_102, %c0_103] : memref<8x128xf32, #tpu.memory_space<vmem>>, vector<8x128xf32>
      tpu.vector_store %arg8[%c0_102, %c0_103], %340 {strides = array<i32>} : memref<8x128xf32, #tpu.memory_space<vmem>>, vector<8x128xf32>,
    } else {
    }
    %c0 = arith.constant 0 : index
    %c0_1 = arith.constant 0 : index
    %3 = vector.load %arg2[%c0, %c0_1] : memref<64x32xf32, #tpu.memory_space<vmem>>, vector<64x32xf32>
    %c0_2 = arith.constant 0 : index
    %c0_3 = arith.constant 0 : index
    %c0_4 = arith.constant 0 : index
    %4 = vector.load %arg3[%c0_2, %c0_3, %c0_4] : memref<1x32x384xf32, #tpu.memory_space<vmem>>, vector<1x32x384xf32>
    %5 = vector.shape_cast %4 : vector<1x32x384xf32> to vector<32x384xf32>
    %cst = arith.constant dense<0.000000e+00> : vector<64x384xf32>
    %6 = tpu.matmul %3, %5, %cst {dimension_numbers = #tpu.dot_dimension_numbers<[1], [0], [0], [1], [0, 0, 1, 1], [], []>} : vector<64x32xf32>, vector<32x384xf32>, vector<64x384xf32> -> vector<64x384xf32>
    %c0_5 = arith.constant 0 : index
    %c0_6 = arith.constant 0 : index
    %c0_7 = arith.constant 0 : index
    %7 = vector.load %arg4[%c0_5, %c0_6, %c0_7] : memref<1x1x384xf32, #tpu.memory_space<vmem>>, vector<1x1x384xf32>
    %8 = vector.shape_cast %7 : vector<1x1x384xf32> to vector<1x384xf32>
    %9 = vector.broadcast %8 : vector<1x384xf32> to vector<64x384xf32>
    %10 = arith.addf %6, %9 : vector<64x384xf32>
    %c0_8 = arith.constant 0 : index
    %c0_9 = arith.constant 0 : index
    %11 = vector.load %arg9[%c0_8, %c0_9] : memref<64x384xf32, #tpu.memory_space<vmem>>, vector<64x384xf32>
    tpu.vector_store %arg9[%c0_8, %c0_9], %10 {strides = array<i32>} : memref<64x384xf32, #tpu.memory_space<vmem>>, vector<64x384xf32>,
    %c0_10 = arith.constant 0 : index
    %c0_11 = arith.constant 0 : index
    %c0_12 = arith.constant 0 : index
    %12 = vector.load %arg5[%c0_10, %c0_11, %c0_12] : memref<1x128x384xf32, #tpu.memory_space<vmem>>, vector<1x128x384xf32>
    %13 = vector.shape_cast %12 : vector<1x128x384xf32> to vector<128x384xf32>
    %c0_13 = arith.constant 0 : index
    %c0_14 = arith.constant 0 : index
    %c0_15 = arith.constant 0 : index
    %14 = vector.load %arg6[%c0_13, %c0_14, %c0_15] : memref<1x1x128xf32, #tpu.memory_space<vmem>>, vector<1x1x128xf32>
    %15 = vector.shape_cast %14 : vector<1x1x128xf32> to vector<1x128xf32>
    %16 = vector.shape_cast %15 : vector<1x128xf32> to vector<1x128xf32>
    %17 = vector.broadcast %16 : vector<1x128xf32> to vector<8x128xf32>
    %c0_16 = arith.constant 0 : index
    %c0_17 = arith.constant 0 : index
    %18 = vector.load %arg8[%c0_16, %c0_17] : memref<8x128xf32, #tpu.memory_space<vmem>>, vector<8x128xf32>
    %c0_i32_18 = arith.constant 0 : i32
    %c2_i32 = arith.constant 2 : i32
    %19 = arith.muli %c2_i32, %c0_i32_18 : i32
    %c7_i32 = arith.constant 7 : i32
    %20 = arith.subi %c7_i32, %19 : i32
    %21 = arith.muli %arg0, %20 : i32
    %22 = arith.addi %c0_i32_18, %21 : i32
    %c8_i32 = arith.constant 8 : i32
    %23 = arith.muli %22, %c8_i32 : i32
    %24 = tpu.assume_multiple %23, 8 : i32
    %25 = arith.index_cast %24 : i32 to index
    %c0_19 = arith.constant 0 : index
    %26 = vector.load %arg9[%25, %c0_19] : memref<64x384xf32, #tpu.memory_space<vmem>>, vector<8x384xf32>
    %cst_20 = arith.constant dense<0.000000e+00> : vector<8x384xf32>
    %27 = tpu.matmul %18, %13, %cst_20 {dimension_numbers = #tpu.dot_dimension_numbers<[1], [0], [0], [1], [0, 0, 1, 1], [], []>} : vector<8x128xf32>, vector<128x384xf32>, vector<8x384xf32> -> vector<8x384xf32>
    %28 = vector.extract_strided_slice %26 {offsets = [0, 0], sizes = [8, 128], strides = [1, 1]} : vector<8x384xf32> to vector<8x128xf32>
    %29 = vector.extract_strided_slice %27 {offsets = [0, 0], sizes = [8, 128], strides = [1, 1]} : vector<8x384xf32> to vector<8x128xf32>
    %30 = arith.addf %28, %29 : vector<8x128xf32>
    %31 = arith.negf %30 : vector<8x128xf32>
    %32 = math.exp %31 : vector<8x128xf32>
    %cst_21 = arith.constant 1.000000e+00 : f32
    %33 = vector.broadcast %cst_21 : f32 to vector<8x128xf32>
    %34 = arith.addf %33, %32 : vector<8x128xf32>
    %35 = arith.divf %33, %34 : vector<8x128xf32>
    %36 = vector.extract_strided_slice %26 {offsets = [0, 128], sizes = [8, 128], strides = [1, 1]} : vector<8x384xf32> to vector<8x128xf32>
    %37 = vector.extract_strided_slice %27 {offsets = [0, 128], sizes = [8, 128], strides = [1, 1]} : vector<8x384xf32> to vector<8x128xf32>
    %38 = arith.addf %36, %37 : vector<8x128xf32>
    %39 = arith.negf %38 : vector<8x128xf32>
    %40 = math.exp %39 : vector<8x128xf32>
    %cst_22 = arith.constant 1.000000e+00 : f32
    %41 = vector.broadcast %cst_22 : f32 to vector<8x128xf32>
    %42 = arith.addf %41, %40 : vector<8x128xf32>
    %43 = arith.divf %41, %42 : vector<8x128xf32>
    %44 = vector.extract_strided_slice %26 {offsets = [0, 256], sizes = [8, 128], strides = [1, 1]} : vector<8x384xf32> to vector<8x128xf32>
    %45 = vector.extract_strided_slice %27 {offsets = [0, 256], sizes = [8, 128], strides = [1, 1]} : vector<8x384xf32> to vector<8x128xf32>
    %46 = arith.addf %45, %17 : vector<8x128xf32>
    %47 = arith.mulf %35, %46 : vector<8x128xf32>
    %48 = arith.addf %44, %47 : vector<8x128xf32>
    %49 = math.tanh %48 : vector<8x128xf32>
    %cst_23 = arith.constant 1.000000e+00 : f32
    %50 = vector.broadcast %cst_23 : f32 to vector<8x128xf32>
    %51 = arith.subf %50, %43 : vector<8x128xf32>
    %52 = arith.mulf %51, %49 : vector<8x128xf32>
    %53 = arith.mulf %43, %18 : vector<8x128xf32>
    %54 = arith.addf %52, %53 : vector<8x128xf32>
    %55 = arith.index_cast %22 : i32 to index
    %c0_24 = arith.constant 0 : index
    %c0_25 = arith.constant 0 : index
    %56 = vector.load %arg7[%55, %c0_24, %c0_25] : memref<8x8x128xf32, #tpu.memory_space<vmem>>, vector<1x8x128xf32>
    %57 = vector.shape_cast %56 : vector<1x8x128xf32> to vector<8x128xf32>
    %58 = vector.shape_cast %54 : vector<8x128xf32> to vector<1x8x128xf32>
    tpu.vector_store %arg7[%55, %c0_24, %c0_25], %58 {strides = array<i32>} : memref<8x8x128xf32, #tpu.memory_space<vmem>>, vector<1x8x128xf32>,
    %c1_i32 = arith.constant 1 : i32
    %c2_i32_26 = arith.constant 2 : i32
    %59 = arith.muli %c2_i32_26, %c1_i32 : i32
    %c7_i32_27 = arith.constant 7 : i32
    %60 = arith.subi %c7_i32_27, %59 : i32
    %61 = arith.muli %arg0, %60 : i32
    %62 = arith.addi %c1_i32, %61 : i32
    %c8_i32_28 = arith.constant 8 : i32
    %63 = arith.muli %62, %c8_i32_28 : i32
    %64 = tpu.assume_multiple %63, 8 : i32
    %65 = arith.index_cast %64 : i32 to index
    %c0_29 = arith.constant 0 : index
    %66 = vector.load %arg9[%65, %c0_29] : memref<64x384xf32, #tpu.memory_space<vmem>>, vector<8x384xf32>
    %cst_30 = arith.constant dense<0.000000e+00> : vector<8x384xf32>
    %67 = tpu.matmul %54, %13, %cst_30 {dimension_numbers = #tpu.dot_dimension_numbers<[1], [0], [0], [1], [0, 0, 1, 1], [], []>} : vector<8x128xf32>, vector<128x384xf32>, vector<8x384xf32> -> vector<8x384xf32>
    %68 = vector.extract_strided_slice %66 {offsets = [0, 0], sizes = [8, 128], strides = [1, 1]} : vector<8x384xf32> to vector<8x128xf32>
    %69 = vector.extract_strided_slice %67 {offsets = [0, 0], sizes = [8, 128], strides = [1, 1]} : vector<8x384xf32> to vector<8x128xf32>
    %70 = arith.addf %68, %69 : vector<8x128xf32>
    %71 = arith.negf %70 : vector<8x128xf32>
    %72 = math.exp %71 : vector<8x128xf32>
    %cst_31 = arith.constant 1.000000e+00 : f32
    %73 = vector.broadcast %cst_31 : f32 to vector<8x128xf32>
    %74 = arith.addf %73, %72 : vector<8x128xf32>
    %75 = arith.divf %73, %74 : vector<8x128xf32>
    %76 = vector.extract_strided_slice %66 {offsets = [0, 128], sizes = [8, 128], strides = [1, 1]} : vector<8x384xf32> to vector<8x128xf32>
    %77 = vector.extract_strided_slice %67 {offsets = [0, 128], sizes = [8, 128], strides = [1, 1]} : vector<8x384xf32> to vector<8x128xf32>
    %78 = arith.addf %76, %77 : vector<8x128xf32>
    %79 = arith.negf %78 : vector<8x128xf32>
    %80 = math.exp %79 : vector<8x128xf32>
    %cst_32 = arith.constant 1.000000e+00 : f32
    %81 = vector.broadcast %cst_32 : f32 to vector<8x128xf32>
    %82 = arith.addf %81, %80 : vector<8x128xf32>
    %83 = arith.divf %81, %82 : vector<8x128xf32>
    %84 = vector.extract_strided_slice %66 {offsets = [0, 256], sizes = [8, 128], strides = [1, 1]} : vector<8x384xf32> to vector<8x128xf32>
    %85 = vector.extract_strided_slice %67 {offsets = [0, 256], sizes = [8, 128], strides = [1, 1]} : vector<8x384xf32> to vector<8x128xf32>
    %86 = arith.addf %85, %17 : vector<8x128xf32>
    %87 = arith.mulf %75, %86 : vector<8x128xf32>
    %88 = arith.addf %84, %87 : vector<8x128xf32>
    %89 = math.tanh %88 : vector<8x128xf32>
    %cst_33 = arith.constant 1.000000e+00 : f32
    %90 = vector.broadcast %cst_33 : f32 to vector<8x128xf32>
    %91 = arith.subf %90, %83 : vector<8x128xf32>
    %92 = arith.mulf %91, %89 : vector<8x128xf32>
    %93 = arith.mulf %83, %54 : vector<8x128xf32>
    %94 = arith.addf %92, %93 : vector<8x128xf32>
    %95 = arith.index_cast %62 : i32 to index
    %c0_34 = arith.constant 0 : index
    %c0_35 = arith.constant 0 : index
    %96 = vector.load %arg7[%95, %c0_34, %c0_35] : memref<8x8x128xf32, #tpu.memory_space<vmem>>, vector<1x8x128xf32>
    %97 = vector.shape_cast %96 : vector<1x8x128xf32> to vector<8x128xf32>
    %98 = vector.shape_cast %94 : vector<8x128xf32> to vector<1x8x128xf32>
    tpu.vector_store %arg7[%95, %c0_34, %c0_35], %98 {strides = array<i32>} : memref<8x8x128xf32, #tpu.memory_space<vmem>>, vector<1x8x128xf32>,
    %c2_i32_36 = arith.constant 2 : i32
    %c2_i32_37 = arith.constant 2 : i32
    %99 = arith.muli %c2_i32_37, %c2_i32_36 : i32
    %c7_i32_38 = arith.constant 7 : i32
    %100 = arith.subi %c7_i32_38, %99 : i32
    %101 = arith.muli %arg0, %100 : i32
    %102 = arith.addi %c2_i32_36, %101 : i32
    %c8_i32_39 = arith.constant 8 : i32
    %103 = arith.muli %102, %c8_i32_39 : i32
    %104 = tpu.assume_multiple %103, 8 : i32
    %105 = arith.index_cast %104 : i32 to index
    %c0_40 = arith.constant 0 : index
    %106 = vector.load %arg9[%105, %c0_40] : memref<64x384xf32, #tpu.memory_space<vmem>>, vector<8x384xf32>
    %cst_41 = arith.constant dense<0.000000e+00> : vector<8x384xf32>
    %107 = tpu.matmul %94, %13, %cst_41 {dimension_numbers = #tpu.dot_dimension_numbers<[1], [0], [0], [1], [0, 0, 1, 1], [], []>} : vector<8x128xf32>, vector<128x384xf32>, vector<8x384xf32> -> vector<8x384xf32>
    %108 = vector.extract_strided_slice %106 {offsets = [0, 0], sizes = [8, 128], strides = [1, 1]} : vector<8x384xf32> to vector<8x128xf32>
    %109 = vector.extract_strided_slice %107 {offsets = [0, 0], sizes = [8, 128], strides = [1, 1]} : vector<8x384xf32> to vector<8x128xf32>
    %110 = arith.addf %108, %109 : vector<8x128xf32>
    %111 = arith.negf %110 : vector<8x128xf32>
    %112 = math.exp %111 : vector<8x128xf32>
    %cst_42 = arith.constant 1.000000e+00 : f32
    %113 = vector.broadcast %cst_42 : f32 to vector<8x128xf32>
    %114 = arith.addf %113, %112 : vector<8x128xf32>
    %115 = arith.divf %113, %114 : vector<8x128xf32>
    %116 = vector.extract_strided_slice %106 {offsets = [0, 128], sizes = [8, 128], strides = [1, 1]} : vector<8x384xf32> to vector<8x128xf32>
    %117 = vector.extract_strided_slice %107 {offsets = [0, 128], sizes = [8, 128], strides = [1, 1]} : vector<8x384xf32> to vector<8x128xf32>
    %118 = arith.addf %116, %117 : vector<8x128xf32>
    %119 = arith.negf %118 : vector<8x128xf32>
    %120 = math.exp %119 : vector<8x128xf32>
    %cst_43 = arith.constant 1.000000e+00 : f32
    %121 = vector.broadcast %cst_43 : f32 to vector<8x128xf32>
    %122 = arith.addf %121, %120 : vector<8x128xf32>
    %123 = arith.divf %121, %122 : vector<8x128xf32>
    %124 = vector.extract_strided_slice %106 {offsets = [0, 256], sizes = [8, 128], strides = [1, 1]} : vector<8x384xf32> to vector<8x128xf32>
    %125 = vector.extract_strided_slice %107 {offsets = [0, 256], sizes = [8, 128], strides = [1, 1]} : vector<8x384xf32> to vector<8x128xf32>
    %126 = arith.addf %125, %17 : vector<8x128xf32>
    %127 = arith.mulf %115, %126 : vector<8x128xf32>
    %128 = arith.addf %124, %127 : vector<8x128xf32>
    %129 = math.tanh %128 : vector<8x128xf32>
    %cst_44 = arith.constant 1.000000e+00 : f32
    %130 = vector.broadcast %cst_44 : f32 to vector<8x128xf32>
    %131 = arith.subf %130, %123 : vector<8x128xf32>
    %132 = arith.mulf %131, %129 : vector<8x128xf32>
    %133 = arith.mulf %123, %94 : vector<8x128xf32>
    %134 = arith.addf %132, %133 : vector<8x128xf32>
    %135 = arith.index_cast %102 : i32 to index
    %c0_45 = arith.constant 0 : index
    %c0_46 = arith.constant 0 : index
    %136 = vector.load %arg7[%135, %c0_45, %c0_46] : memref<8x8x128xf32, #tpu.memory_space<vmem>>, vector<1x8x128xf32>
    %137 = vector.shape_cast %136 : vector<1x8x128xf32> to vector<8x128xf32>
    %138 = vector.shape_cast %134 : vector<8x128xf32> to vector<1x8x128xf32>
    tpu.vector_store %arg7[%135, %c0_45, %c0_46], %138 {strides = array<i32>} : memref<8x8x128xf32, #tpu.memory_space<vmem>>, vector<1x8x128xf32>,
    %c3_i32 = arith.constant 3 : i32
    %c2_i32_47 = arith.constant 2 : i32
    %139 = arith.muli %c2_i32_47, %c3_i32 : i32
    %c7_i32_48 = arith.constant 7 : i32
    %140 = arith.subi %c7_i32_48, %139 : i32
    %141 = arith.muli %arg0, %140 : i32
    %142 = arith.addi %c3_i32, %141 : i32
    %c8_i32_49 = arith.constant 8 : i32
    %143 = arith.muli %142, %c8_i32_49 : i32
    %144 = tpu.assume_multiple %143, 8 : i32
    %145 = arith.index_cast %144 : i32 to index
    %c0_50 = arith.constant 0 : index
    %146 = vector.load %arg9[%145, %c0_50] : memref<64x384xf32, #tpu.memory_space<vmem>>, vector<8x384xf32>
    %cst_51 = arith.constant dense<0.000000e+00> : vector<8x384xf32>
    %147 = tpu.matmul %134, %13, %cst_51 {dimension_numbers = #tpu.dot_dimension_numbers<[1], [0], [0], [1], [0, 0, 1, 1], [], []>} : vector<8x128xf32>, vector<128x384xf32>, vector<8x384xf32> -> vector<8x384xf32>
    %148 = vector.extract_strided_slice %146 {offsets = [0, 0], sizes = [8, 128], strides = [1, 1]} : vector<8x384xf32> to vector<8x128xf32>
    %149 = vector.extract_strided_slice %147 {offsets = [0, 0], sizes = [8, 128], strides = [1, 1]} : vector<8x384xf32> to vector<8x128xf32>
    %150 = arith.addf %148, %149 : vector<8x128xf32>
    %151 = arith.negf %150 : vector<8x128xf32>
    %152 = math.exp %151 : vector<8x128xf32>
    %cst_52 = arith.constant 1.000000e+00 : f32
    %153 = vector.broadcast %cst_52 : f32 to vector<8x128xf32>
    %154 = arith.addf %153, %152 : vector<8x128xf32>
    %155 = arith.divf %153, %154 : vector<8x128xf32>
    %156 = vector.extract_strided_slice %146 {offsets = [0, 128], sizes = [8, 128], strides = [1, 1]} : vector<8x384xf32> to vector<8x128xf32>
    %157 = vector.extract_strided_slice %147 {offsets = [0, 128], sizes = [8, 128], strides = [1, 1]} : vector<8x384xf32> to vector<8x128xf32>
    %158 = arith.addf %156, %157 : vector<8x128xf32>
    %159 = arith.negf %158 : vector<8x128xf32>
    %160 = math.exp %159 : vector<8x128xf32>
    %cst_53 = arith.constant 1.000000e+00 : f32
    %161 = vector.broadcast %cst_53 : f32 to vector<8x128xf32>
    %162 = arith.addf %161, %160 : vector<8x128xf32>
    %163 = arith.divf %161, %162 : vector<8x128xf32>
    %164 = vector.extract_strided_slice %146 {offsets = [0, 256], sizes = [8, 128], strides = [1, 1]} : vector<8x384xf32> to vector<8x128xf32>
    %165 = vector.extract_strided_slice %147 {offsets = [0, 256], sizes = [8, 128], strides = [1, 1]} : vector<8x384xf32> to vector<8x128xf32>
    %166 = arith.addf %165, %17 : vector<8x128xf32>
    %167 = arith.mulf %155, %166 : vector<8x128xf32>
    %168 = arith.addf %164, %167 : vector<8x128xf32>
    %169 = math.tanh %168 : vector<8x128xf32>
    %cst_54 = arith.constant 1.000000e+00 : f32
    %170 = vector.broadcast %cst_54 : f32 to vector<8x128xf32>
    %171 = arith.subf %170, %163 : vector<8x128xf32>
    %172 = arith.mulf %171, %169 : vector<8x128xf32>
    %173 = arith.mulf %163, %134 : vector<8x128xf32>
    %174 = arith.addf %172, %173 : vector<8x128xf32>
    %175 = arith.index_cast %142 : i32 to index
    %c0_55 = arith.constant 0 : index
    %c0_56 = arith.constant 0 : index
    %176 = vector.load %arg7[%175, %c0_55, %c0_56] : memref<8x8x128xf32, #tpu.memory_space<vmem>>, vector<1x8x128xf32>
    %177 = vector.shape_cast %176 : vector<1x8x128xf32> to vector<8x128xf32>
    %178 = vector.shape_cast %174 : vector<8x128xf32> to vector<1x8x128xf32>
    tpu.vector_store %arg7[%175, %c0_55, %c0_56], %178 {strides = array<i32>} : memref<8x8x128xf32, #tpu.memory_space<vmem>>, vector<1x8x128xf32>,
    %c4_i32 = arith.constant 4 : i32
    %c2_i32_57 = arith.constant 2 : i32
    %179 = arith.muli %c2_i32_57, %c4_i32 : i32
    %c7_i32_58 = arith.constant 7 : i32
    %180 = arith.subi %c7_i32_58, %179 : i32
    %181 = arith.muli %arg0, %180 : i32
    %182 = arith.addi %c4_i32, %181 : i32
    %c8_i32_59 = arith.constant 8 : i32
    %183 = arith.muli %182, %c8_i32_59 : i32
    %184 = tpu.assume_multiple %183, 8 : i32
    %185 = arith.index_cast %184 : i32 to index
    %c0_60 = arith.constant 0 : index
    %186 = vector.load %arg9[%185, %c0_60] : memref<64x384xf32, #tpu.memory_space<vmem>>, vector<8x384xf32>
    %cst_61 = arith.constant dense<0.000000e+00> : vector<8x384xf32>
    %187 = tpu.matmul %174, %13, %cst_61 {dimension_numbers = #tpu.dot_dimension_numbers<[1], [0], [0], [1], [0, 0, 1, 1], [], []>} : vector<8x128xf32>, vector<128x384xf32>, vector<8x384xf32> -> vector<8x384xf32>
    %188 = vector.extract_strided_slice %186 {offsets = [0, 0], sizes = [8, 128], strides = [1, 1]} : vector<8x384xf32> to vector<8x128xf32>
    %189 = vector.extract_strided_slice %187 {offsets = [0, 0], sizes = [8, 128], strides = [1, 1]} : vector<8x384xf32> to vector<8x128xf32>
    %190 = arith.addf %188, %189 : vector<8x128xf32>
    %191 = arith.negf %190 : vector<8x128xf32>
    %192 = math.exp %191 : vector<8x128xf32>
    %cst_62 = arith.constant 1.000000e+00 : f32
    %193 = vector.broadcast %cst_62 : f32 to vector<8x128xf32>
    %194 = arith.addf %193, %192 : vector<8x128xf32>
    %195 = arith.divf %193, %194 : vector<8x128xf32>
    %196 = vector.extract_strided_slice %186 {offsets = [0, 128], sizes = [8, 128], strides = [1, 1]} : vector<8x384xf32> to vector<8x128xf32>
    %197 = vector.extract_strided_slice %187 {offsets = [0, 128], sizes = [8, 128], strides = [1, 1]} : vector<8x384xf32> to vector<8x128xf32>
    %198 = arith.addf %196, %197 : vector<8x128xf32>
    %199 = arith.negf %198 : vector<8x128xf32>
    %200 = math.exp %199 : vector<8x128xf32>
    %cst_63 = arith.constant 1.000000e+00 : f32
    %201 = vector.broadcast %cst_63 : f32 to vector<8x128xf32>
    %202 = arith.addf %201, %200 : vector<8x128xf32>
    %203 = arith.divf %201, %202 : vector<8x128xf32>
    %204 = vector.extract_strided_slice %186 {offsets = [0, 256], sizes = [8, 128], strides = [1, 1]} : vector<8x384xf32> to vector<8x128xf32>
    %205 = vector.extract_strided_slice %187 {offsets = [0, 256], sizes = [8, 128], strides = [1, 1]} : vector<8x384xf32> to vector<8x128xf32>
    %206 = arith.addf %205, %17 : vector<8x128xf32>
    %207 = arith.mulf %195, %206 : vector<8x128xf32>
    %208 = arith.addf %204, %207 : vector<8x128xf32>
    %209 = math.tanh %208 : vector<8x128xf32>
    %cst_64 = arith.constant 1.000000e+00 : f32
    %210 = vector.broadcast %cst_64 : f32 to vector<8x128xf32>
    %211 = arith.subf %210, %203 : vector<8x128xf32>
    %212 = arith.mulf %211, %209 : vector<8x128xf32>
    %213 = arith.mulf %203, %174 : vector<8x128xf32>
    %214 = arith.addf %212, %213 : vector<8x128xf32>
    %215 = arith.index_cast %182 : i32 to index
    %c0_65 = arith.constant 0 : index
    %c0_66 = arith.constant 0 : index
    %216 = vector.load %arg7[%215, %c0_65, %c0_66] : memref<8x8x128xf32, #tpu.memory_space<vmem>>, vector<1x8x128xf32>
    %217 = vector.shape_cast %216 : vector<1x8x128xf32> to vector<8x128xf32>
    %218 = vector.shape_cast %214 : vector<8x128xf32> to vector<1x8x128xf32>
    tpu.vector_store %arg7[%215, %c0_65, %c0_66], %218 {strides = array<i32>} : memref<8x8x128xf32, #tpu.memory_space<vmem>>, vector<1x8x128xf32>,
    %c5_i32 = arith.constant 5 : i32
    %c2_i32_67 = arith.constant 2 : i32
    %219 = arith.muli %c2_i32_67, %c5_i32 : i32
    %c7_i32_68 = arith.constant 7 : i32
    %220 = arith.subi %c7_i32_68, %219 : i32
    %221 = arith.muli %arg0, %220 : i32
    %222 = arith.addi %c5_i32, %221 : i32
    %c8_i32_69 = arith.constant 8 : i32
    %223 = arith.muli %222, %c8_i32_69 : i32
    %224 = tpu.assume_multiple %223, 8 : i32
    %225 = arith.index_cast %224 : i32 to index
    %c0_70 = arith.constant 0 : index
    %226 = vector.load %arg9[%225, %c0_70] : memref<64x384xf32, #tpu.memory_space<vmem>>, vector<8x384xf32>
    %cst_71 = arith.constant dense<0.000000e+00> : vector<8x384xf32>
    %227 = tpu.matmul %214, %13, %cst_71 {dimension_numbers = #tpu.dot_dimension_numbers<[1], [0], [0], [1], [0, 0, 1, 1], [], []>} : vector<8x128xf32>, vector<128x384xf32>, vector<8x384xf32> -> vector<8x384xf32>
    %228 = vector.extract_strided_slice %226 {offsets = [0, 0], sizes = [8, 128], strides = [1, 1]} : vector<8x384xf32> to vector<8x128xf32>
    %229 = vector.extract_strided_slice %227 {offsets = [0, 0], sizes = [8, 128], strides = [1, 1]} : vector<8x384xf32> to vector<8x128xf32>
    %230 = arith.addf %228, %229 : vector<8x128xf32>
    %231 = arith.negf %230 : vector<8x128xf32>
    %232 = math.exp %231 : vector<8x128xf32>
    %cst_72 = arith.constant 1.000000e+00 : f32
    %233 = vector.broadcast %cst_72 : f32 to vector<8x128xf32>
    %234 = arith.addf %233, %232 : vector<8x128xf32>
    %235 = arith.divf %233, %234 : vector<8x128xf32>
    %236 = vector.extract_strided_slice %226 {offsets = [0, 128], sizes = [8, 128], strides = [1, 1]} : vector<8x384xf32> to vector<8x128xf32>
    %237 = vector.extract_strided_slice %227 {offsets = [0, 128], sizes = [8, 128], strides = [1, 1]} : vector<8x384xf32> to vector<8x128xf32>
    %238 = arith.addf %236, %237 : vector<8x128xf32>
    %239 = arith.negf %238 : vector<8x128xf32>
    %240 = math.exp %239 : vector<8x128xf32>
    %cst_73 = arith.constant 1.000000e+00 : f32
    %241 = vector.broadcast %cst_73 : f32 to vector<8x128xf32>
    %242 = arith.addf %241, %240 : vector<8x128xf32>
    %243 = arith.divf %241, %242 : vector<8x128xf32>
    %244 = vector.extract_strided_slice %226 {offsets = [0, 256], sizes = [8, 128], strides = [1, 1]} : vector<8x384xf32> to vector<8x128xf32>
    %245 = vector.extract_strided_slice %227 {offsets = [0, 256], sizes = [8, 128], strides = [1, 1]} : vector<8x384xf32> to vector<8x128xf32>
    %246 = arith.addf %245, %17 : vector<8x128xf32>
    %247 = arith.mulf %235, %246 : vector<8x128xf32>
    %248 = arith.addf %244, %247 : vector<8x128xf32>
    %249 = math.tanh %248 : vector<8x128xf32>
    %cst_74 = arith.constant 1.000000e+00 : f32
    %250 = vector.broadcast %cst_74 : f32 to vector<8x128xf32>
    %251 = arith.subf %250, %243 : vector<8x128xf32>
    %252 = arith.mulf %251, %249 : vector<8x128xf32>
    %253 = arith.mulf %243, %214 : vector<8x128xf32>
    %254 = arith.addf %252, %253 : vector<8x128xf32>
    %255 = arith.index_cast %222 : i32 to index
    %c0_75 = arith.constant 0 : index
    %c0_76 = arith.constant 0 : index
    %256 = vector.load %arg7[%255, %c0_75, %c0_76] : memref<8x8x128xf32, #tpu.memory_space<vmem>>, vector<1x8x128xf32>
    %257 = vector.shape_cast %256 : vector<1x8x128xf32> to vector<8x128xf32>
    %258 = vector.shape_cast %254 : vector<8x128xf32> to vector<1x8x128xf32>
    tpu.vector_store %arg7[%255, %c0_75, %c0_76], %258 {strides = array<i32>} : memref<8x8x128xf32, #tpu.memory_space<vmem>>, vector<1x8x128xf32>,
    %c6_i32 = arith.constant 6 : i32
    %c2_i32_77 = arith.constant 2 : i32
    %259 = arith.muli %c2_i32_77, %c6_i32 : i32
    %c7_i32_78 = arith.constant 7 : i32
    %260 = arith.subi %c7_i32_78, %259 : i32
    %261 = arith.muli %arg0, %260 : i32
    %262 = arith.addi %c6_i32, %261 : i32
    %c8_i32_79 = arith.constant 8 : i32
    %263 = arith.muli %262, %c8_i32_79 : i32
    %264 = tpu.assume_multiple %263, 8 : i32
    %265 = arith.index_cast %264 : i32 to index
    %c0_80 = arith.constant 0 : index
    %266 = vector.load %arg9[%265, %c0_80] : memref<64x384xf32, #tpu.memory_space<vmem>>, vector<8x384xf32>
    %cst_81 = arith.constant dense<0.000000e+00> : vector<8x384xf32>
    %267 = tpu.matmul %254, %13, %cst_81 {dimension_numbers = #tpu.dot_dimension_numbers<[1], [0], [0], [1], [0, 0, 1, 1], [], []>} : vector<8x128xf32>, vector<128x384xf32>, vector<8x384xf32> -> vector<8x384xf32>
    %268 = vector.extract_strided_slice %266 {offsets = [0, 0], sizes = [8, 128], strides = [1, 1]} : vector<8x384xf32> to vector<8x128xf32>
    %269 = vector.extract_strided_slice %267 {offsets = [0, 0], sizes = [8, 128], strides = [1, 1]} : vector<8x384xf32> to vector<8x128xf32>
    %270 = arith.addf %268, %269 : vector<8x128xf32>
    %271 = arith.negf %270 : vector<8x128xf32>
    %272 = math.exp %271 : vector<8x128xf32>
    %cst_82 = arith.constant 1.000000e+00 : f32
    %273 = vector.broadcast %cst_82 : f32 to vector<8x128xf32>
    %274 = arith.addf %273, %272 : vector<8x128xf32>
    %275 = arith.divf %273, %274 : vector<8x128xf32>
    %276 = vector.extract_strided_slice %266 {offsets = [0, 128], sizes = [8, 128], strides = [1, 1]} : vector<8x384xf32> to vector<8x128xf32>
    %277 = vector.extract_strided_slice %267 {offsets = [0, 128], sizes = [8, 128], strides = [1, 1]} : vector<8x384xf32> to vector<8x128xf32>
    %278 = arith.addf %276, %277 : vector<8x128xf32>
    %279 = arith.negf %278 : vector<8x128xf32>
    %280 = math.exp %279 : vector<8x128xf32>
    %cst_83 = arith.constant 1.000000e+00 : f32
    %281 = vector.broadcast %cst_83 : f32 to vector<8x128xf32>
    %282 = arith.addf %281, %280 : vector<8x128xf32>
    %283 = arith.divf %281, %282 : vector<8x128xf32>
    %284 = vector.extract_strided_slice %266 {offsets = [0, 256], sizes = [8, 128], strides = [1, 1]} : vector<8x384xf32> to vector<8x128xf32>
    %285 = vector.extract_strided_slice %267 {offsets = [0, 256], sizes = [8, 128], strides = [1, 1]} : vector<8x384xf32> to vector<8x128xf32>
    %286 = arith.addf %285, %17 : vector<8x128xf32>
    %287 = arith.mulf %275, %286 : vector<8x128xf32>
    %288 = arith.addf %284, %287 : vector<8x128xf32>
    %289 = math.tanh %288 : vector<8x128xf32>
    %cst_84 = arith.constant 1.000000e+00 : f32
    %290 = vector.broadcast %cst_84 : f32 to vector<8x128xf32>
    %291 = arith.subf %290, %283 : vector<8x128xf32>
    %292 = arith.mulf %291, %289 : vector<8x128xf32>
    %293 = arith.mulf %283, %254 : vector<8x128xf32>
    %294 = arith.addf %292, %293 : vector<8x128xf32>
    %295 = arith.index_cast %262 : i32 to index
    %c0_85 = arith.constant 0 : index
    %c0_86 = arith.constant 0 : index
    %296 = vector.load %arg7[%295, %c0_85, %c0_86] : memref<8x8x128xf32, #tpu.memory_space<vmem>>, vector<1x8x128xf32>
    %297 = vector.shape_cast %296 : vector<1x8x128xf32> to vector<8x128xf32>
    %298 = vector.shape_cast %294 : vector<8x128xf32> to vector<1x8x128xf32>
    tpu.vector_store %arg7[%295, %c0_85, %c0_86], %298 {strides = array<i32>} : memref<8x8x128xf32, #tpu.memory_space<vmem>>, vector<1x8x128xf32>,
    %c7_i32_87 = arith.constant 7 : i32
    %c2_i32_88 = arith.constant 2 : i32
    %299 = arith.muli %c2_i32_88, %c7_i32_87 : i32
    %c7_i32_89 = arith.constant 7 : i32
    %300 = arith.subi %c7_i32_89, %299 : i32
    %301 = arith.muli %arg0, %300 : i32
    %302 = arith.addi %c7_i32_87, %301 : i32
    %c8_i32_90 = arith.constant 8 : i32
    %303 = arith.muli %302, %c8_i32_90 : i32
    %304 = tpu.assume_multiple %303, 8 : i32
    %305 = arith.index_cast %304 : i32 to index
    %c0_91 = arith.constant 0 : index
    %306 = vector.load %arg9[%305, %c0_91] : memref<64x384xf32, #tpu.memory_space<vmem>>, vector<8x384xf32>
    %cst_92 = arith.constant dense<0.000000e+00> : vector<8x384xf32>
    %307 = tpu.matmul %294, %13, %cst_92 {dimension_numbers = #tpu.dot_dimension_numbers<[1], [0], [0], [1], [0, 0, 1, 1], [], []>} : vector<8x128xf32>, vector<128x384xf32>, vector<8x384xf32> -> vector<8x384xf32>
    %308 = vector.extract_strided_slice %306 {offsets = [0, 0], sizes = [8, 128], strides = [1, 1]} : vector<8x384xf32> to vector<8x128xf32>
    %309 = vector.extract_strided_slice %307 {offsets = [0, 0], sizes = [8, 128], strides = [1, 1]} : vector<8x384xf32> to vector<8x128xf32>
    %310 = arith.addf %308, %309 : vector<8x128xf32>
    %311 = arith.negf %310 : vector<8x128xf32>
    %312 = math.exp %311 : vector<8x128xf32>
    %cst_93 = arith.constant 1.000000e+00 : f32
    %313 = vector.broadcast %cst_93 : f32 to vector<8x128xf32>
    %314 = arith.addf %313, %312 : vector<8x128xf32>
    %315 = arith.divf %313, %314 : vector<8x128xf32>
    %316 = vector.extract_strided_slice %306 {offsets = [0, 128], sizes = [8, 128], strides = [1, 1]} : vector<8x384xf32> to vector<8x128xf32>
    %317 = vector.extract_strided_slice %307 {offsets = [0, 128], sizes = [8, 128], strides = [1, 1]} : vector<8x384xf32> to vector<8x128xf32>
    %318 = arith.addf %316, %317 : vector<8x128xf32>
    %319 = arith.negf %318 : vector<8x128xf32>
    %320 = math.exp %319 : vector<8x128xf32>
    %cst_94 = arith.constant 1.000000e+00 : f32
    %321 = vector.broadcast %cst_94 : f32 to vector<8x128xf32>
    %322 = arith.addf %321, %320 : vector<8x128xf32>
    %323 = arith.divf %321, %322 : vector<8x128xf32>
    %324 = vector.extract_strided_slice %306 {offsets = [0, 256], sizes = [8, 128], strides = [1, 1]} : vector<8x384xf32> to vector<8x128xf32>
    %325 = vector.extract_strided_slice %307 {offsets = [0, 256], sizes = [8, 128], strides = [1, 1]} : vector<8x384xf32> to vector<8x128xf32>
    %326 = arith.addf %325, %17 : vector<8x128xf32>
    %327 = arith.mulf %315, %326 : vector<8x128xf32>
    %328 = arith.addf %324, %327 : vector<8x128xf32>
    %329 = math.tanh %328 : vector<8x128xf32>
    %cst_95 = arith.constant 1.000000e+00 : f32
    %330 = vector.broadcast %cst_95 : f32 to vector<8x128xf32>
    %331 = arith.subf %330, %323 : vector<8x128xf32>
    %332 = arith.mulf %331, %329 : vector<8x128xf32>
    %333 = arith.mulf %323, %294 : vector<8x128xf32>
    %334 = arith.addf %332, %333 : vector<8x128xf32>
    %335 = arith.index_cast %302 : i32 to index
    %c0_96 = arith.constant 0 : index
    %c0_97 = arith.constant 0 : index
    %336 = vector.load %arg7[%335, %c0_96, %c0_97] : memref<8x8x128xf32, #tpu.memory_space<vmem>>, vector<1x8x128xf32>
    %337 = vector.shape_cast %336 : vector<1x8x128xf32> to vector<8x128xf32>
    %338 = vector.shape_cast %334 : vector<8x128xf32> to vector<1x8x128xf32>
    tpu.vector_store %arg7[%335, %c0_96, %c0_97], %338 {strides = array<i32>} : memref<8x8x128xf32, #tpu.memory_space<vmem>>, vector<1x8x128xf32>,
    %c8_i32_98 = arith.constant 8 : i32
    %c0_99 = arith.constant 0 : index
    %c0_100 = arith.constant 0 : index
    %339 = vector.load %arg8[%c0_99, %c0_100] : memref<8x128xf32, #tpu.memory_space<vmem>>, vector<8x128xf32>
    tpu.vector_store %arg8[%c0_99, %c0_100], %334 {strides = array<i32>} : memref<8x128xf32, #tpu.memory_space<vmem>>, vector<8x128xf32>,
    return
  }
  func.func @transform_0(%arg0: i32, %arg1: i32) -> (i32, i32) {
    %c1_i32 = arith.constant 1 : i32
    %0 = arith.subi %c1_i32, %arg0 : i32
    %1 = arith.muli %arg1, %0 : i32
    %c0_i32 = arith.constant 0 : i32
    %2 = arith.subi %c0_i32, %arg1 : i32
    %3 = arith.muli %2, %arg0 : i32
    %4 = arith.addi %1, %3 : i32
    %c0_i32_0 = arith.constant 0 : i32
    %c0_i32_1 = arith.constant 0 : i32
    return %4, %c0_i32_0 : i32, i32
  }
  func.func @transform_1(%arg0: i32, %arg1: i32) -> (i32, i32, i32) {
    %c0_i32 = arith.constant 0 : i32
    %c0_i32_0 = arith.constant 0 : i32
    %c0_i32_1 = arith.constant 0 : i32
    return %arg0, %c0_i32, %c0_i32_0 : i32, i32, i32
  }
  func.func @transform_2(%arg0: i32, %arg1: i32) -> (i32, i32, i32) {
    %c0_i32 = arith.constant 0 : i32
    %c0_i32_0 = arith.constant 0 : i32
    %c0_i32_1 = arith.constant 0 : i32
    return %arg0, %c0_i32, %c0_i32_0 : i32, i32, i32
  }
  func.func @transform_3(%arg0: i32, %arg1: i32) -> (i32, i32, i32) {
    %c0_i32 = arith.constant 0 : i32
    %c0_i32_0 = arith.constant 0 : i32
    %c0_i32_1 = arith.constant 0 : i32
    return %arg0, %c0_i32, %c0_i32_0 : i32, i32, i32
  }
  func.func @transform_4(%arg0: i32, %arg1: i32) -> (i32, i32, i32) {
    %c0_i32 = arith.constant 0 : i32
    %c0_i32_0 = arith.constant 0 : i32
    %c0_i32_1 = arith.constant 0 : i32
    return %arg0, %c0_i32, %c0_i32_0 : i32, i32, i32
  }
  func.func @transform_5(%arg0: i32, %arg1: i32) -> (i32, i32, i32) {
    %c1_i32 = arith.constant 1 : i32
    %0 = arith.subi %c1_i32, %arg0 : i32
    %1 = arith.muli %arg1, %0 : i32
    %c0_i32 = arith.constant 0 : i32
    %2 = arith.subi %c0_i32, %arg1 : i32
    %3 = arith.muli %2, %arg0 : i32
    %4 = arith.addi %1, %3 : i32
    %c0_i32_0 = arith.constant 0 : i32
    %c0_i32_1 = arith.constant 0 : i32
    return %4, %c0_i32_0, %arg0 : i32, i32, i32
  }
}

</mosaic_0001>

<llo_original>
// kernel: tpu_custom_call.1
$region0: #{tpu_custom_call.1}
  #allocation0 [shape = 'u32[]', space=smem, size = 0x4, offset = 0x4, fixed_abs, tag = 'smem constant byte address 0x4 - core index']
  #allocation1 [shape = 'u32[144,128]{1,0:T(1,128)}', space=vmem, size = 0x12000, scoped, tag = 'internal scratch']
  #allocation2 [shape = 'f32[8,128]{1,0:T(8,128)}', space=vmem, size = 0x1000, scoped, tag = 'scratch operand']
  #allocation3 [shape = 'f32[64,384]{1,0:T(8,128)}', space=vmem, size = 0x18000, scoped, tag = 'scratch operand']
  %s0 = inlined_call_operand.vmem [shape: f32[64,32], index: 0, kind: input, shape index: {}]
  %s1 = inlined_call_operand.hbm [shape: f32[2,32,384], index: 1, kind: input, shape index: {}]
  %s2 = inlined_call_operand.vmem [shape: f32[2,1,384], index: 2, kind: input, shape index: {}]
  %s3 = inlined_call_operand.hbm [shape: f32[2,128,384], index: 3, kind: input, shape index: {}]
  %s4 = inlined_call_operand.vmem [shape: f32[2,1,128], index: 4, kind: input, shape index: {}]
  %s5 = inlined_call_operand.hbm [shape: f32[8,8,256], index: 5, kind: output, shape index: {}]
  %s6 = sld [smem:[#allocation0]]
  $region65: #{tpu_custom_call.1} parent=0
    _
  %s8 = ssub.s32 1, %s6
  %s9 = scalar_select 0, %s8, %s6
  $region1: #{tpu_custom_call.1} parent=0
    #allocation4 [shape = 'u8[98304]{0}', space=vmem, size = 0x18000, scoped, tag = 'input window, operand 1']
    #allocation5 [shape = 's32[2]{0}', space=sflag, size = 0x8, scoped, tag = 'scoped memory for tpu_custom_call.1']
    #allocation6 [shape = 's32[2]{0}', space=sflag, size = 0x8, scoped, tag = 'scoped memory for tpu_custom_call.1']
    #allocation7 [shape = 'u8[393216]{0}', space=vmem, size = 0x60000, scoped, tag = 'input window, operand 3']
    #allocation8 [shape = 's32[2]{0}', space=sflag, size = 0x8, scoped, tag = 'scoped memory for tpu_custom_call.1']
    #allocation9 [shape = 'u8[65536]{0}', space=vmem, size = 0x10000, scoped, tag = 'output window, operand 0']
    %10 = vsyncpa [#allocation5], 0
    %s11 = scalar_lea.sflag [#allocation5], 1
    %12 = vsyncpa %s11, 0
    %13 = vsyncpa [#allocation8], 0
    %s14 = scalar_lea.sflag [#allocation8], 1
    %15 = vsyncpa %s14, 0
    %16 = vsyncpa [#allocation6], 0
    %s17 = scalar_lea.sflag [#allocation6], 1
    %18 = vsyncpa %s17, 0
    loop: start=0, step=1, limit=4
    $region2: #{tpu_custom_call.1} parent=1 // loop_pre_header
      _
    $region3: #{tpu_custom_call.1} parent=1 // loop_header
      %s20 = sphi 0, %s24
      %p21 = scmp.ge.s32.totalorder %s20, 4
      %s27 = sphi 0, %s39
      %s28 = sphi 0, %s35
      %s29 = sphi 0, %s27
      %s30 = sphi 0, %s28
      %s31 = sphi 0, %s29
      %s32 = sphi 0, %s30
      %s52 = sphi 0, %s54
      %s55 = sphi 0, %s52
      %s56 = sphi 0, %s55
      %s72 = sphi 0, %s56
      %s78 = sphi 0, %s80
      %s81 = sphi 0, %s78
      %s82 = sphi 0, %s81
      %s98 = sphi 0, %s82
      %s104 = sphi 0, %s106
      %s107 = sphi 0, %s104
      %s108 = sphi 0, %s107
      %s124 = sphi 0, %s108
      %s130 = sphi 0, %s132
      %s133 = sphi 0, %s130
      %s134 = sphi 0, %s133
      %s150 = sphi 0, %s134
      %s156 = sphi 0, %s158
      %s159 = sphi 0, %s156
      %s160 = sphi 0, %s159
      %s176 = sphi 0, %s160
      %s194 = sphi 0, %s196
      %s197 = sphi 0, %s194
      %s198 = sphi 0, %s197
      %s214 = sphi 0, %s198
    $region4: #{tpu_custom_call.1} parent=1 // loop_header_branch
      %23 = sbr.rel (%p21) target = $region8
    $region5: #{tpu_custom_call.1} parent=1 // loop_body
      %s25 = ssub.s32 %s20, 1
      %s26 = ssub.s32 %s20, 2
      %s33 = sadd.s32 1, %s28
      %p34 = scmp.ge.s32.totalorder %s33, 1
      %s35 = scalar_select %p34, 0, %s33
      %s36 = sadd.s32 1, %s27
      %s37 = scalar_select %p34, %s36, %s27
      %p38 = scmp.ge.s32.totalorder %s37, 2
      %s39 = scalar_select %p38, 0, %s37
      %s40 = ssub.s32 1, %s27
      %s41 = smul.u32 %s28, %s40
      %s42 = ssub.s32 0, %s28
      %s43 = smul.u32 %s42, %s27
      %s44 = sadd.s32 %s41, %s43
      %s45 = ssub.s32 1, %s39
      %s46 = smul.u32 %s35, %s45
      %s47 = ssub.s32 0, %s35
      %s48 = smul.u32 %s47, %s39
      %s49 = sadd.s32 %s46, %s48
      %s50 = ssub.s32 %s44, %s49
      %p51 = scmp.eq.s32.totalorder %s50, 0
      %s53 = sadd.s32 %s52, 1
      %s54 = scalar_select %p51, %s52, %s53
      %p57 = pneg %p51
      %p58 = scmp.eq.s32.totalorder %s20, 1
      %p59 = por %p57, %p58
      %p60 = scmp.ne.s32.totalorder %s52, %s55
      %p61 = scmp.eq.s32.totalorder %s20, 0
      %p62 = por %p60, %p61
      %p63 = scmp.ne.s32.totalorder %s52, %s55
      %p64 = scmp.eq.s32.totalorder %s25, 1
      %p65 = por %p63, %p64
      %p66 = scmp.ne.s32.totalorder %s55, %s56
      %p67 = scmp.eq.s32.totalorder %s25, 0
      %p68 = por %p66, %p67
      %p69 = scmp.ne.s32.totalorder %s55, %s56
      %p70 = scmp.eq.s32.totalorder %s26, 1
      %p71 = por %p69, %p70
      %p73 = scmp.ne.s32.totalorder %s56, %s72
      %p74 = scmp.eq.s32.totalorder %s26, 0
      %p75 = por %p73, %p74
      %s76 = ssub.s32 %s27, %s39
      %p77 = scmp.eq.s32.totalorder %s76, 0
      %s79 = sadd.s32 %s78, 1
      %s80 = scalar_select %p77, %s78, %s79
      %p83 = pneg %p77
      %p84 = scmp.eq.s32.totalorder %s20, 1
      %p85 = por %p83, %p84
      %p86 = scmp.ne.s32.totalorder %s78, %s81
      %p87 = scmp.eq.s32.totalorder %s20, 0
      %p88 = por %p86, %p87
      %p89 = scmp.ne.s32.totalorder %s78, %s81
      %p90 = scmp.eq.s32.totalorder %s25, 1
      %p91 = por %p89, %p90
      %p92 = scmp.ne.s32.totalorder %s81, %s82
      %p93 = scmp.eq.s32.totalorder %s25, 0
      %p94 = por %p92, %p93
      %p95 = scmp.ne.s32.totalorder %s81, %s82
      %p96 = scmp.eq.s32.totalorder %s26, 1
      %p97 = por %p95, %p96
      %p99 = scmp.ne.s32.totalorder %s82, %s98
      %p100 = scmp.eq.s32.totalorder %s26, 0
      %p101 = por %p99, %p100
      %s102 = ssub.s32 %s27, %s39
      %p103 = scmp.eq.s32.totalorder %s102, 0
      %s105 = sadd.s32 %s104, 1
      %s106 = scalar_select %p103, %s104, %s105
      %p109 = pneg %p103
      %p110 = scmp.eq.s32.totalorder %s20, 1
      %p111 = por %p109, %p110
      %p112 = scmp.ne.s32.totalorder %s104, %s107
      %p113 = scmp.eq.s32.totalorder %s20, 0
      %p114 = por %p112, %p113
      %p115 = scmp.ne.s32.totalorder %s104, %s107
      %p116 = scmp.eq.s32.totalorder %s25, 1
      %p117 = por %p115, %p116
      %p118 = scmp.ne.s32.totalorder %s107, %s108
      %p119 = scmp.eq.s32.totalorder %s25, 0
      %p120 = por %p118, %p119
      %p121 = scmp.ne.s32.totalorder %s107, %s108
      %p122 = scmp.eq.s32.totalorder %s26, 1
      %p123 = por %p121, %p122
      %p125 = scmp.ne.s32.totalorder %s108, %s124
      %p126 = scmp.eq.s32.totalorder %s26, 0
      %p127 = por %p125, %p126
      %s128 = ssub.s32 %s27, %s39
      %p129 = scmp.eq.s32.totalorder %s128, 0
      %s131 = sadd.s32 %s130, 1
      %s132 = scalar_select %p129, %s130, %s131
      %p135 = pneg %p129
      %p136 = scmp.eq.s32.totalorder %s20, 1
      %p137 = por %p135, %p136
      %p138 = scmp.ne.s32.totalorder %s130, %s133
      %p139 = scmp.eq.s32.totalorder %s20, 0
      %p140 = por %p138, %p139
      %p141 = scmp.ne.s32.totalorder %s130, %s133
      %p142 = scmp.eq.s32.totalorder %s25, 1
      %p143 = por %p141, %p142
      %p144 = scmp.ne.s32.totalorder %s133, %s134
      %p145 = scmp.eq.s32.totalorder %s25, 0
      %p146 = por %p144, %p145
      %p147 = scmp.ne.s32.totalorder %s133, %s134
      %p148 = scmp.eq.s32.totalorder %s26, 1
      %p149 = por %p147, %p148
      %p151 = scmp.ne.s32.totalorder %s134, %s150
      %p152 = scmp.eq.s32.totalorder %s26, 0
      %p153 = por %p151, %p152
      %s154 = ssub.s32 %s27, %s39
      %p155 = scmp.eq.s32.totalorder %s154, 0
      %s157 = sadd.s32 %s156, 1
      %s158 = scalar_select %p155, %s156, %s157
      %p161 = pneg %p155
      %p162 = scmp.eq.s32.totalorder %s20, 1
      %p163 = por %p161, %p162
      %p164 = scmp.ne.s32.totalorder %s156, %s159
      %p165 = scmp.eq.s32.totalorder %s20, 0
      %p166 = por %p164, %p165
      %p167 = scmp.ne.s32.totalorder %s156, %s159
      %p168 = scmp.eq.s32.totalorder %s25, 1
      %p169 = por %p167, %p168
      %p170 = scmp.ne.s32.totalorder %s159, %s160
      %p171 = scmp.eq.s32.totalorder %s25, 0
      %p172 = por %p170, %p171
      %p173 = scmp.ne.s32.totalorder %s159, %s160
      %p174 = scmp.eq.s32.totalorder %s26, 1
      %p175 = por %p173, %p174
      %p177 = scmp.ne.s32.totalorder %s160, %s176
      %p178 = scmp.eq.s32.totalorder %s26, 0
      %p179 = por %p177, %p178
      %s180 = ssub.s32 1, %s27
      %s181 = smul.u32 %s28, %s180
      %s182 = ssub.s32 0, %s28
      %s183 = smul.u32 %s182, %s27
      %s184 = sadd.s32 %s181, %s183
      %s185 = ssub.s32 1, %s39
      %s186 = smul.u32 %s35, %s185
      %s187 = ssub.s32 0, %s35
      %s188 = smul.u32 %s187, %s39
      %s189 = sadd.s32 %s186, %s188
      %s190 = ssub.s32 %s184, %s189
      %s191 = ssub.s32 %s27, %s39
      %s192 = sor.u32 %s190, %s191
      %p193 = scmp.eq.s32.totalorder %s192, 0
      %s195 = sadd.s32 %s194, 1
      %s196 = scalar_select %p193, %s194, %s195
      %p199 = pneg %p193
      %p200 = scmp.eq.s32.totalorder %s20, 1
      %p201 = por %p199, %p200
      %p202 = scmp.ne.s32.totalorder %s194, %s197
      %p203 = scmp.eq.s32.totalorder %s20, 0
      %p204 = por %p202, %p203
      %p205 = scmp.ne.s32.totalorder %s194, %s197
      %p206 = scmp.eq.s32.totalorder %s25, 1
      %p207 = por %p205, %p206
      %p208 = scmp.ne.s32.totalorder %s197, %s198
      %p209 = scmp.eq.s32.totalorder %s25, 0
      %p210 = por %p208, %p209
      %p211 = scmp.ne.s32.totalorder %s197, %s198
      %p212 = scmp.eq.s32.totalorder %s26, 1
      %p213 = por %p211, %p212
      %p215 = scmp.ne.s32.totalorder %s198, %s214
      %p216 = scmp.eq.s32.totalorder %s26, 0
      %p217 = por %p215, %p216
      %p218 = scmp.le.s32.totalorder 1, %s20
      %p219 = scmp.lt.s32.totalorder %s20, 3
      %p220 = pnand %p218, %p219
      %p221 = pneg %p220
      // Predicated region
      $region9: #{tpu_custom_call.1} parent=5 // pred_check
        _
      $region10: #{tpu_custom_call.1} parent=5 // pred_check_branch
        %223 = sbr.rel (%p220) target = $region12
      $region11: #{tpu_custom_call.1} parent=5 // pred_region
        %s224 = ssub.s32 %s20, 1
      $region12: #{tpu_custom_call.1} parent=5 // pred_fallthru
        _
      %p225 = scmp.lt.s32.totalorder %s20, 2
      // Predicated region
      $region13: #{tpu_custom_call.1} parent=5 // pred_check
        %p226 = pneg %p225
      $region14: #{tpu_custom_call.1} parent=5 // pred_check_branch
        %228 = sbr.rel (%p226) target = $region16
      $region15: #{tpu_custom_call.1} parent=5 // pred_region
        // Predicated region
        $region17: #{tpu_custom_call.1} parent=15 // pred_check
          %p229 = pneg %p62
        $region18: #{tpu_custom_call.1} parent=15 // pred_check_branch
          %231 = sbr.rel (%p229) target = $region20
        $region19: #{tpu_custom_call.1} parent=15 // pred_region
          %s232 = ssub.s32 1, %s27
          %s233 = smul.u32 %s28, %s232
          %s234 = ssub.s32 0, %s28
          %s235 = smul.u32 %s234, %s27
          %s236 = sadd.s32 %s233, %s235
          %s237 = smul.u32 8, %s236
          %p238 = scmp.lt.s32.totalorder %s237, 7
          %s239 = scalar_select %p238, %s237, 7
          %s240 = smul.addr %s239, 8
          %s241 = scalar_lea.vmem %s0, %s240
          %s242 = ssub.s32 1, %s27
          %s243 = smul.u32 %s28, %s242
          %s244 = ssub.s32 0, %s28
          %s245 = smul.u32 %s244, %s27
          %s246 = sadd.s32 %s243, %s245
          %s247 = smul.u32 8, %s246
        $region20: #{tpu_custom_call.1} parent=15 // pred_fallthru
          _
        // Predicated region
        $region21: #{tpu_custom_call.1} parent=15 // pred_check
          %p248 = pneg %p88
        $region22: #{tpu_custom_call.1} parent=15 // pred_check_branch
          %250 = sbr.rel (%p248) target = $region24
        $region23: #{tpu_custom_call.1} parent=15 // pred_region
          %s251 = sand.u32 %s78, 1
          %s252 = scalar_lea.sflag [#allocation5], %s251
          %s253 = sand.u32 %s78, 1
          %s254 = smul.addr %s253, 96
          %s255 = scalar_lea.vmem [#allocation4], %s254
          %s257 = ssub.s32 1536, 1536
          %258 = vsyncadd %s252, %s257
          %s259 = smul.addr %s27, 12
          %s260 = smul.addr %s259, 128
          %s261 = scalar_lea.hbm %s1, %s260
          %s262 = sshll.u32 %s255, 4
          %s263 = int_to_ptr.vmem [resolvable:$true] %s262
          %268 = dma.hbm_to_vmem [thread:$0]  %s261, 1536, %s263, %s252, 384, 384, 24
        $region24: #{tpu_custom_call.1} parent=15 // pred_fallthru
          _
        // Predicated region
        $region25: #{tpu_custom_call.1} parent=15 // pred_check
          %p269 = pneg %p114
        $region26: #{tpu_custom_call.1} parent=15 // pred_check_branch
          %271 = sbr.rel (%p269) target = $region28
        $region27: #{tpu_custom_call.1} parent=15 // pred_region
          %p272 = scmp.lt.s32.totalorder %s27, 1
          %s273 = scalar_select %p272, %s27, 1
          %s274 = smul.addr %s273, 3
          %s275 = scalar_lea.vmem %s2, %s274
        $region28: #{tpu_custom_call.1} parent=15 // pred_fallthru
          _
        // Predicated region
        $region29: #{tpu_custom_call.1} parent=15 // pred_check
          %p276 = pneg %p140
        $region30: #{tpu_custom_call.1} parent=15 // pred_check_branch
          %278 = sbr.rel (%p276) target = $region32
        $region31: #{tpu_custom_call.1} parent=15 // pred_region
          %s279 = sand.u32 %s130, 1
          %s280 = scalar_lea.sflag [#allocation8], %s279
          %s281 = sand.u32 %s130, 1
          %s282 = smul.addr %s281, 384
          %s283 = scalar_lea.vmem [#allocation7], %s282
          %s285 = ssub.s32 6144, 6144
          %286 = vsyncadd %s280, %s285
          %s287 = smul.addr %s27, 48
          %s288 = smul.addr %s287, 128
          %s289 = scalar_lea.hbm %s3, %s288
          %s290 = sshll.u32 %s283, 4
          %s291 = int_to_ptr.vmem [resolvable:$true] %s290
          %296 = dma.hbm_to_vmem [thread:$0]  %s289, 6144, %s291, %s280, 384, 384, 24
        $region32: #{tpu_custom_call.1} parent=15 // pred_fallthru
          _
        // Predicated region
        $region33: #{tpu_custom_call.1} parent=15 // pred_check
          %p297 = pneg %p166
        $region34: #{tpu_custom_call.1} parent=15 // pred_check_branch
          %299 = sbr.rel (%p297) target = $region36
        $region35: #{tpu_custom_call.1} parent=15 // pred_region
          %p300 = scmp.lt.s32.totalorder %s27, 1
          %s301 = scalar_select %p300, %s27, 1
          %s302 = scalar_lea.vmem %s4, %s301
        $region36: #{tpu_custom_call.1} parent=15 // pred_fallthru
          _
      $region16: #{tpu_custom_call.1} parent=5 // pred_fallthru
        _
      %p303 = scmp.le.s32.totalorder 1, %s20
      %p304 = scmp.lt.s32.totalorder %s20, 3
      %p305 = pnand %p303, %p304
      %p306 = pneg %p305
      // Predicated region
      $region37: #{tpu_custom_call.1} parent=5 // pred_check
        _
      $region38: #{tpu_custom_call.1} parent=5 // pred_check_branch
        %308 = sbr.rel (%p305) target = $region40
      $region39: #{tpu_custom_call.1} parent=5 // pred_region
        %s309 = ssub.s32 %s20, 1
        %s310 = sand.u32 %s81, 1
        %s311 = scalar_lea.sflag [#allocation5], %s310
        %s312 = sand.u32 %s81, 1
        %s313 = smul.addr %s312, 96
        %s314 = scalar_lea.vmem [#allocation4], %s313
        // Predicated region
        $region41: #{tpu_custom_call.1} parent=39 // pred_check
          %p315 = pneg %p94
        $region42: #{tpu_custom_call.1} parent=39 // pred_check_branch
          %317 = sbr.rel (%p315) target = $region44
        $region43: #{tpu_custom_call.1} parent=39 // pred_region
          %318 = dma.done %s311, 1536
        $region44: #{tpu_custom_call.1} parent=39 // pred_fallthru
          _
        %s319 = sand.u32 %s133, 1
        %s320 = scalar_lea.sflag [#allocation8], %s319
        %s321 = sand.u32 %s133, 1
        %s322 = smul.addr %s321, 384
        %s323 = scalar_lea.vmem [#allocation7], %s322
        // Predicated region
        $region45: #{tpu_custom_call.1} parent=39 // pred_check
          %p324 = pneg %p146
        $region46: #{tpu_custom_call.1} parent=39 // pred_check_branch
          %326 = sbr.rel (%p324) target = $region48
        $region47: #{tpu_custom_call.1} parent=39 // pred_region
          %327 = dma.done %s320, 6144
        $region48: #{tpu_custom_call.1} parent=39 // pred_fallthru
          _
        %s328 = ssub.s32 1, %s29
        %s329 = smul.u32 %s30, %s328
        %s330 = ssub.s32 0, %s30
        %s331 = smul.u32 %s330, %s29
        %s332 = sadd.s32 %s329, %s331
        %s333 = smul.u32 8, %s332
        %p334 = scmp.lt.s32.totalorder %s333, 7
        %s335 = scalar_select %p334, %s333, 7
        %s336 = smul.addr %s335, 8
        %s337 = scalar_lea.vmem %s0, %s336
        %p338 = pneg %p68
        %p339 = pneg %p65
        %s340 = sand.u32 %s81, 1
        %s341 = scalar_lea.sflag [#allocation5], %s340
        %s342 = sand.u32 %s81, 1
        %s343 = smul.addr %s342, 96
        %s344 = scalar_lea.vmem [#allocation4], %s343
        %p345 = pneg %p94
        %p346 = pneg %p91
        %p347 = scmp.lt.s32.totalorder %s29, 1
        %s348 = scalar_select %p347, %s29, 1
        %s349 = smul.addr %s348, 3
        %s350 = scalar_lea.vmem %s2, %s349
        %p351 = pneg %p120
        %p352 = pneg %p117
        %s353 = sand.u32 %s133, 1
        %s354 = scalar_lea.sflag [#allocation8], %s353
        %s355 = sand.u32 %s133, 1
        %s356 = smul.addr %s355, 384
        %s357 = scalar_lea.vmem [#allocation7], %s356
        %p358 = pneg %p146
        %p359 = pneg %p143
        %p360 = scmp.lt.s32.totalorder %s29, 1
        %s361 = scalar_select %p360, %s29, 1
        %s362 = scalar_lea.vmem %s4, %s361
        %p363 = pneg %p172
        %p364 = pneg %p169
        %p365 = pneg %p210
        %p366 = pneg %p207
        %s367 = sand.u32 %s197, 1
        %s368 = scalar_lea.sflag [#allocation6], %s367
        %s369 = sand.u32 %s197, 1
        %s370 = smul.addr %s369, 64
        %s371 = scalar_lea.vmem [#allocation9], %s370
        %s372 = ssub.s32 1, %s29
        %s373 = smul.u32 %s30, %s372
        %s374 = ssub.s32 0, %s30
        %s375 = smul.u32 %s374, %s29
        %s376 = sadd.s32 %s373, %s375
        %s377 = smul.u32 8, %s376
        %p378 = scmp.lt.s32.totalorder %s377, 7
        %s379 = scalar_select %p378, %s377, 7
        %s380 = smul.addr %s379, 8
        %s381 = scalar_lea.vmem %s0, %s380
        %s382 = ssub.s32 1, %s29
        %s383 = smul.u32 %s30, %s382
        %s384 = ssub.s32 0, %s30
        %s385 = smul.u32 %s384, %s29
        %s386 = sadd.s32 %s383, %s385
        %s387 = smul.u32 8, %s386
        %p388 = scmp.lt.s32.totalorder %s29, 1
        %s389 = scalar_select %p388, %s29, 1
        %s390 = smul.addr %s389, 3
        %s391 = scalar_lea.vmem %s2, %s390
        %p392 = scmp.lt.s32.totalorder %s29, 1
        %s393 = scalar_select %p392, %s29, 1
        %s394 = scalar_lea.vmem %s4, %s393
        %s395 = ssub.s32 1, %s29
        %s396 = smul.u32 %s30, %s395
        %s397 = ssub.s32 0, %s30
        %s398 = smul.u32 %s397, %s29
        %s399 = sadd.s32 %s396, %s398
        %s400 = smul.u32 8, %s399
        %p401 = scmp.eq.s32.totalorder %s30, 0
        // Predicated region
        $region49: #{tpu_custom_call.1} parent=39 // pred_check
          %p402 = pneg %p401
        $region50: #{tpu_custom_call.1} parent=39 // pred_check_branch
          %404 = sbr.rel (%p402) target = $region52
        $region51: #{tpu_custom_call.1} parent=39 // pred_region
          %405 = vst [vmem:[#allocation2] sm:$0xff] 0.0
        $region52: #{tpu_custom_call.1} parent=39 // pred_fallthru
          _
        %v406 = vld [vmem:[%s381] sm:$0xff]
        %v407 = vld [vmem:[%s381 + $0x8] sm:$0xff]
        %v408 = vld [vmem:[%s381 + $0x10] sm:$0xff]
        %v409 = vld [vmem:[%s381 + $0x18] sm:$0xff]
        %v410 = vld [vmem:[%s381 + $0x20] sm:$0xff]
        %v411 = vld [vmem:[%s381 + $0x28] sm:$0xff]
        %v412 = vld [vmem:[%s381 + $0x30] sm:$0xff]
        %v413 = vld [vmem:[%s381 + $0x38] sm:$0xff]
        %v414 = vld [vmem:[%s314] sm:$0xff]
        %v415 = vld [vmem:[%s314 + $0x8] sm:$0xff]
        %v416 = vld [vmem:[%s314 + $0x10] sm:$0xff]
        %v417 = vld [vmem:[%s314 + $0x18] sm:$0xff]
        %v418 = vld [vmem:[%s314 + $0x20] sm:$0xff]
        %v419 = vld [vmem:[%s314 + $0x28] sm:$0xff]
        %v420 = vld [vmem:[%s314 + $0x30] sm:$0xff]
        %v421 = vld [vmem:[%s314 + $0x38] sm:$0xff]
        %v422 = vld [vmem:[%s314 + $0x40] sm:$0xff]
        %v423 = vld [vmem:[%s314 + $0x48] sm:$0xff]
        %v424 = vld [vmem:[%s314 + $0x50] sm:$0xff]
        %v425 = vld [vmem:[%s314 + $0x58] sm:$0xff]
        %v426 = vld [vmem:[%s391] sm:$0x7]
        %v428 = vlaneseq
        %v429 = vshrl.u32 %v428, 7
        %v430 = vsub.s32 0, %v429
        %v431 = vrot.slane %v426, %v430
        %v432 = vlaneseq
        %v433 = vshrl.u32 %v432, 7
        %v434 = vsub.s32 1, %v433
        %v435 = vrot.slane %v426, %v434
        %v436 = vlaneseq
        %v437 = vshrl.u32 %v436, 7
        %v438 = vsub.s32 2, %v437
        %v439 = vrot.slane %v426, %v438
        %vm443 = vcmask 261120
        %v445 = vsel %vm443, %v406, 0
        %v448 = vsel %vm443, %v407, 0
        %v451 = vsel %vm443, %v408, 0
        %v454 = vsel %vm443, %v409, 0
        %v457 = vsel %vm443, %v410, 0
        %v460 = vsel %vm443, %v411, 0
        %v463 = vsel %vm443, %v412, 0
        %v466 = vsel %vm443, %v413, 0
        %468 = vmatprep.subr.mxu0 %v415
        %469 = vmatpush1.msra.mxu0 %v414
        %470 = vmatprep.subr.mxu0 %v418
        %471 = vmatpush1.msra.mxu0 %v417
        %472 = vmatprep.subr.mxu0 %v421
        %473 = vmatpush1.msra.mxu0 %v420
        %474 = vmatprep.subr.mxu0 %v424
        %475 = vmatpush1.msra.mxu0 %v423
        %476 = vmatprep.subr.mxu0 0.0
        %477 = vmatpush1.msra.mxu0 0.0
        %478 = vmatprep.subr.mxu0 0.0
        %479 = vmatpush1.msra.mxu0 0.0
        %480 = vmatprep.subr.mxu0 0.0
        %481 = vmatpush1.msra.mxu0 0.0
        %482 = vmatprep.subr.mxu0 0.0
        %483 = vmatpush1.msra.mxu0 0.0
        %484 = vmatprep.subr.mxu0 0.0
        %485 = vmatpush1.msra.mxu0 0.0
        %486 = vmatprep.subr.mxu0 0.0
        %487 = vmatpush1.msra.mxu0 0.0
        %488 = vmatprep.subr.mxu0 0.0
        %489 = vmatpush1.msra.mxu0 0.0
        %490 = vmatprep.subr.mxu0 0.0
        %491 = vmatpush1.msra.mxu0 0.0
        %492 = vmatprep.subr.mxu0 0.0
        %493 = vmatpush1.msra.mxu0 0.0
        %494 = vmatprep.subr.mxu0 0.0
        %495 = vmatpush1.msra.mxu0 0.0
        %496 = vmatprep.subr.mxu0 0.0
        %497 = vmatpush1.msra.mxu0 0.0
        %498 = vmatprep.subr.mxu0 0.0
        %499 = vmatpush1.msra.mxu0 0.0
        %500 = vmatprep.subr.mxu0 0.0
        %501 = vmatpush1.msra.mxu0 0.0
        %502 = vmatprep.subr.mxu0 0.0
        %503 = vmatpush1.msra.mxu0 0.0
        %504 = vmatprep.subr.mxu0 0.0
        %505 = vmatpush1.msra.mxu0 0.0
        %506 = vmatprep.subr.mxu0 0.0
        %507 = vmatpush1.msra.mxu0 0.0
        %508 = vmatprep.subr.mxu0 0.0
        %509 = vmatpush1.msra.mxu0 0.0
        %510 = vmatprep.subr.mxu0 0.0
        %511 = vmatpush1.msra.mxu0 0.0
        %512 = vmatprep.subr.mxu0 0.0
        %513 = vmatpush1.msra.mxu0 0.0
        %514 = vmatprep.subr.mxu0 0.0
        %515 = vmatpush1.msra.mxu0 0.0
        %516 = vmatprep.subr.mxu0 0.0
        %517 = vmatpush1.msra.mxu0 0.0
        %518 = vmatprep.subr.mxu0 0.0
        %519 = vmatpush1.msra.mxu0 0.0
        %520 = vmatprep.subr.mxu0 0.0
        %521 = vmatpush1.msra.mxu0 0.0
        %522 = vmatprep.subr.mxu0 0.0
        %523 = vmatpush1.msra.mxu0 0.0
        %524 = vmatprep.subr.mxu0 0.0
        %525 = vmatpush1.msra.mxu0 0.0
        %526 = vmatprep.subr.mxu0 0.0
        %527 = vmatpush1.msra.mxu0 0.0
        %528 = vmatprep.subr.mxu0 0.0
        %529 = vmatpush1.msra.mxu0 0.0
        %530 = vmatprep.subr.mxu0 0.0
        %531 = vmatpush1.msra.mxu0 0.0
        %532 = vmatprep.mubr.f32.mxu0 0.0
        %533 = vmatmul.mubr.f32.gmra.mrb[0].mxu0 %v445
        %v534 = vpop.f32.mrb[0].mxu0
        %v535 = vadd.f32 %v431, %v534
        %v536 = vpop.f32.mrb[0].mxu0
        %v537 = vadd.f32 %v435, %v536
        %538 = vmatprep.mubr.f32.mxu0 0.0
        %539 = vmatmul.mubr.f32.gmra.mrb[0].mxu0 %v448
        %v540 = vpop.f32.mrb[0].mxu0
        %v541 = vadd.f32 %v431, %v540
        %v542 = vpop.f32.mrb[0].mxu0
        %v543 = vadd.f32 %v435, %v542
        %544 = vmatprep.mubr.f32.mxu0 0.0
        %545 = vmatmul.mubr.f32.gmra.mrb[0].mxu0 %v451
        %v546 = vpop.f32.mrb[0].mxu0
        %v547 = vadd.f32 %v431, %v546
        %v548 = vpop.f32.mrb[0].mxu0
        %v549 = vadd.f32 %v435, %v548
        %550 = vmatprep.mubr.f32.mxu0 0.0
        %551 = vmatmul.mubr.f32.gmra.mrb[0].mxu0 %v454
        %v552 = vpop.f32.mrb[0].mxu0
        %v553 = vadd.f32 %v431, %v552
        %v554 = vpop.f32.mrb[0].mxu0
        %v555 = vadd.f32 %v435, %v554
        %556 = vmatprep.mubr.f32.mxu0 0.0
        %557 = vmatmul.mubr.f32.gmra.mrb[0].mxu0 %v457
        %v558 = vpop.f32.mrb[0].mxu0
        %v559 = vadd.f32 %v431, %v558
        %v560 = vpop.f32.mrb[0].mxu0
        %v561 = vadd.f32 %v435, %v560
        %562 = vmatprep.mubr.f32.mxu0 0.0
        %563 = vmatmul.mubr.f32.gmra.mrb[0].mxu0 %v460
        %v564 = vpop.f32.mrb[0].mxu0
        %v565 = vadd.f32 %v431, %v564
        %v566 = vpop.f32.mrb[0].mxu0
        %v567 = vadd.f32 %v435, %v566
        %568 = vmatprep.mubr.f32.mxu0 0.0
        %569 = vmatmul.mubr.f32.gmra.mrb[0].mxu0 %v463
        %v570 = vpop.f32.mrb[0].mxu0
        %v571 = vadd.f32 %v431, %v570
        %v572 = vpop.f32.mrb[0].mxu0
        %v573 = vadd.f32 %v435, %v572
        %574 = vmatprep.mubr.f32.mxu0 0.0
        %575 = vmatmul.mubr.f32.gmra.mrb[0].mxu0 %v466
        %v576 = vpop.f32.mrb[0].mxu0
        %v577 = vadd.f32 %v431, %v576
        %v578 = vpop.f32.mrb[0].mxu0
        %v579 = vadd.f32 %v435, %v578
        %580 = vdwg.mxu0
        %581 = vmatprep.subr.mxu0 0.0
        %582 = vmatpush1.msra.mxu0 %v416
        %583 = vmatprep.subr.mxu0 0.0
        %584 = vmatpush1.msra.mxu0 %v419
        %585 = vmatprep.subr.mxu0 0.0
        %586 = vmatpush1.msra.mxu0 %v422
        %587 = vmatprep.subr.mxu0 0.0
        %588 = vmatpush1.msra.mxu0 %v425
        %589 = vmatprep.subr.mxu0 0.0
        %590 = vmatpush1.msra.mxu0 0.0
        %591 = vmatprep.subr.mxu0 0.0
        %592 = vmatpush1.msra.mxu0 0.0
        %593 = vmatprep.subr.mxu0 0.0
        %594 = vmatpush1.msra.mxu0 0.0
        %595 = vmatprep.subr.mxu0 0.0
        %596 = vmatpush1.msra.mxu0 0.0
        %597 = vmatprep.subr.mxu0 0.0
        %598 = vmatpush1.msra.mxu0 0.0
        %599 = vmatprep.subr.mxu0 0.0
        %600 = vmatpush1.msra.mxu0 0.0
        %601 = vmatprep.subr.mxu0 0.0
        %602 = vmatpush1.msra.mxu0 0.0
        %603 = vmatprep.subr.mxu0 0.0
        %604 = vmatpush1.msra.mxu0 0.0
        %605 = vmatprep.subr.mxu0 0.0
        %606 = vmatpush1.msra.mxu0 0.0
        %607 = vmatprep.subr.mxu0 0.0
        %608 = vmatpush1.msra.mxu0 0.0
        %609 = vmatprep.subr.mxu0 0.0
        %610 = vmatpush1.msra.mxu0 0.0
        %611 = vmatprep.subr.mxu0 0.0
        %612 = vmatpush1.msra.mxu0 0.0
        %613 = vmatprep.subr.mxu0 0.0
        %614 = vmatpush1.msra.mxu0 0.0
        %615 = vmatprep.subr.mxu0 0.0
        %616 = vmatpush1.msra.mxu0 0.0
        %617 = vmatprep.subr.mxu0 0.0
        %618 = vmatpush1.msra.mxu0 0.0
        %619 = vmatprep.subr.mxu0 0.0
        %620 = vmatpush1.msra.mxu0 0.0
        %621 = vmatprep.subr.mxu0 0.0
        %622 = vmatpush1.msra.mxu0 0.0
        %623 = vmatprep.subr.mxu0 0.0
        %624 = vmatpush1.msra.mxu0 0.0
        %625 = vmatprep.subr.mxu0 0.0
        %626 = vmatpush1.msra.mxu0 0.0
        %627 = vmatprep.subr.mxu0 0.0
        %628 = vmatpush1.msra.mxu0 0.0
        %629 = vmatprep.subr.mxu0 0.0
        %630 = vmatpush1.msra.mxu0 0.0
        %631 = vmatprep.subr.mxu0 0.0
        %632 = vmatpush1.msra.mxu0 0.0
        %633 = vmatprep.subr.mxu0 0.0
        %634 = vmatpush1.msra.mxu0 0.0
        %635 = vmatprep.subr.mxu0 0.0
        %636 = vmatpush1.msra.mxu0 0.0
        %637 = vmatprep.subr.mxu0 0.0
        %638 = vmatpush1.msra.mxu0 0.0
        %639 = vmatprep.subr.mxu0 0.0
        %640 = vmatpush1.msra.mxu0 0.0
        %641 = vmatprep.subr.mxu0 0.0
        %642 = vmatpush1.msra.mxu0 0.0
        %643 = vmatprep.subr.mxu0 0.0
        %644 = vmatpush1.msra.mxu0 0.0
        %645 = vmatprep.mubr.f32.mxu0 0.0
        %646 = vmatmul.mubr.f32.gmra.mrb[0].mxu0 %v445
        %v647 = vpop.f32.mrb[0].mxu0
        %v648 = vadd.f32 %v439, %v647
        %v649 = vpop.f32.mrb[0].mxu0
        %650 = vmatprep.mubr.f32.mxu0 0.0
        %651 = vmatmul.mubr.f32.gmra.mrb[0].mxu0 %v448
        %v652 = vpop.f32.mrb[0].mxu0
        %v653 = vadd.f32 %v439, %v652
        %v654 = vpop.f32.mrb[0].mxu0
        %655 = vmatprep.mubr.f32.mxu0 0.0
        %656 = vmatmul.mubr.f32.gmra.mrb[0].mxu0 %v451
        %v657 = vpop.f32.mrb[0].mxu0
        %v658 = vadd.f32 %v439, %v657
        %v659 = vpop.f32.mrb[0].mxu0
        %660 = vmatprep.mubr.f32.mxu0 0.0
        %661 = vmatmul.mubr.f32.gmra.mrb[0].mxu0 %v454
        %v662 = vpop.f32.mrb[0].mxu0
        %v663 = vadd.f32 %v439, %v662
        %v664 = vpop.f32.mrb[0].mxu0
        %665 = vmatprep.mubr.f32.mxu0 0.0
        %666 = vmatmul.mubr.f32.gmra.mrb[0].mxu0 %v457
        %v667 = vpop.f32.mrb[0].mxu0
        %v668 = vadd.f32 %v439, %v667
        %v669 = vpop.f32.mrb[0].mxu0
        %670 = vmatprep.mubr.f32.mxu0 0.0
        %671 = vmatmul.mubr.f32.gmra.mrb[0].mxu0 %v460
        %v672 = vpop.f32.mrb[0].mxu0
        %v673 = vadd.f32 %v439, %v672
        %v674 = vpop.f32.mrb[0].mxu0
        %675 = vmatprep.mubr.f32.mxu0 0.0
        %676 = vmatmul.mubr.f32.gmra.mrb[0].mxu0 %v463
        %v677 = vpop.f32.mrb[0].mxu0
        %v678 = vadd.f32 %v439, %v677
        %v679 = vpop.f32.mrb[0].mxu0
        %680 = vmatprep.mubr.f32.mxu0 0.0
        %681 = vmatmul.mubr.f32.gmra.mrb[0].mxu0 %v466
        %v682 = vpop.f32.mrb[0].mxu0
        %v683 = vadd.f32 %v439, %v682
        %v684 = vpop.f32.mrb[0].mxu0
        %685 = vdwg.mxu0
        %686 = vst [vmem:[#allocation3] sm:$0xff] %v535
        %687 = vst [vmem:[#allocation3 + $0x8] sm:$0xff] %v537
        %688 = vst [vmem:[#allocation3 + $0x10] sm:$0xff] %v648
        %689 = vst [vmem:[#allocation3 + $0x18] sm:$0xff] %v541
        %690 = vst [vmem:[#allocation3 + $0x20] sm:$0xff] %v543
        %691 = vst [vmem:[#allocation3 + $0x28] sm:$0xff] %v653
        %692 = vst [vmem:[#allocation3 + $0x30] sm:$0xff] %v547
        %693 = vst [vmem:[#allocation3 + $0x38] sm:$0xff] %v549
        %694 = vst [vmem:[#allocation3 + $0x40] sm:$0xff] %v658
        %695 = vst [vmem:[#allocation3 + $0x48] sm:$0xff] %v553
        %696 = vst [vmem:[#allocation3 + $0x50] sm:$0xff] %v555
        %697 = vst [vmem:[#allocation3 + $0x58] sm:$0xff] %v663
        %698 = vst [vmem:[#allocation3 + $0x60] sm:$0xff] %v559
        %699 = vst [vmem:[#allocation3 + $0x68] sm:$0xff] %v561
        %700 = vst [vmem:[#allocation3 + $0x70] sm:$0xff] %v668
        %701 = vst [vmem:[#allocation3 + $0x78] sm:$0xff] %v565
        %702 = vst [vmem:[#allocation3 + $0x80] sm:$0xff] %v567
        %703 = vst [vmem:[#allocation3 + $0x88] sm:$0xff] %v673
        %704 = vst [vmem:[#allocation3 + $0x90] sm:$0xff] %v571
        %705 = vst [vmem:[#allocation3 + $0x98] sm:$0xff] %v573
        %706 = vst [vmem:[#allocation3 + $0xa0] sm:$0xff] %v678
        %707 = vst [vmem:[#allocation3 + $0xa8] sm:$0xff] %v577
        %708 = vst [vmem:[#allocation3 + $0xb0] sm:$0xff] %v579
        %709 = vst [vmem:[#allocation3 + $0xb8] sm:$0xff] %v683
        %v710 = vld [vmem:[%s323] sm:$0xff]
        %v711 = vld [vmem:[%s323 + $0x8] sm:$0xff]
        %v712 = vld [vmem:[%s323 + $0x10] sm:$0xff]
        %v713 = vld [vmem:[%s323 + $0x18] sm:$0xff]
        %v714 = vld [vmem:[%s323 + $0x20] sm:$0xff]
        %v715 = vld [vmem:[%s323 + $0x28] sm:$0xff]
        %v716 = vld [vmem:[%s323 + $0x30] sm:$0xff]
        %v717 = vld [vmem:[%s323 + $0x38] sm:$0xff]
        %v718 = vld [vmem:[%s323 + $0x40] sm:$0xff]
        %v719 = vld [vmem:[%s323 + $0x48] sm:$0xff]
        %v720 = vld [vmem:[%s323 + $0x50] sm:$0xff]
        %v721 = vld [vmem:[%s323 + $0x58] sm:$0xff]
        %v722 = vld [vmem:[%s323 + $0x60] sm:$0xff]
        %v723 = vld [vmem:[%s323 + $0x68] sm:$0xff]
        %v724 = vld [vmem:[%s323 + $0x70] sm:$0xff]
        %v725 = vld [vmem:[%s323 + $0x78] sm:$0xff]
        %v726 = vld [vmem:[%s323 + $0x80] sm:$0xff]
        %v727 = vld [vmem:[%s323 + $0x88] sm:$0xff]
        %v728 = vld [vmem:[%s323 + $0x90] sm:$0xff]
        %v729 = vld [vmem:[%s323 + $0x98] sm:$0xff]
        %v730 = vld [vmem:[%s323 + $0xa0] sm:$0xff]
        %v731 = vld [vmem:[%s323 + $0xa8] sm:$0xff]
        %v732 = vld [vmem:[%s323 + $0xb0] sm:$0xff]
        %v733 = vld [vmem:[%s323 + $0xb8] sm:$0xff]
        %v734 = vld [vmem:[%s323 + $0xc0] sm:$0xff]
        %v735 = vld [vmem:[%s323 + $0xc8] sm:$0xff]
        %v736 = vld [vmem:[%s323 + $0xd0] sm:$0xff]
        %v737 = vld [vmem:[%s323 + $0xd8] sm:$0xff]
        %v738 = vld [vmem:[%s323 + $0xe0] sm:$0xff]
        %v739 = vld [vmem:[%s323 + $0xe8] sm:$0xff]
        %v740 = vld [vmem:[%s323 + $0xf0] sm:$0xff]
        %v741 = vld [vmem:[%s323 + $0xf8] sm:$0xff]
        %v742 = vld [vmem:[%s323 + $0x100] sm:$0xff]
        %v743 = vld [vmem:[%s323 + $0x108] sm:$0xff]
        %v744 = vld [vmem:[%s323 + $0x110] sm:$0xff]
        %v745 = vld [vmem:[%s323 + $0x118] sm:$0xff]
        %v746 = vld [vmem:[%s323 + $0x120] sm:$0xff]
        %v747 = vld [vmem:[%s323 + $0x128] sm:$0xff]
        %v748 = vld [vmem:[%s323 + $0x130] sm:$0xff]
        %v749 = vld [vmem:[%s323 + $0x138] sm:$0xff]
        %v750 = vld [vmem:[%s323 + $0x140] sm:$0xff]
        %v751 = vld [vmem:[%s323 + $0x148] sm:$0xff]
        %v752 = vld [vmem:[%s323 + $0x150] sm:$0xff]
        %v753 = vld [vmem:[%s323 + $0x158] sm:$0xff]
        %v754 = vld [vmem:[%s323 + $0x160] sm:$0xff]
        %v755 = vld [vmem:[%s323 + $0x168] sm:$0xff]
        %v756 = vld [vmem:[%s323 + $0x170] sm:$0xff]
        %v757 = vld [vmem:[%s323 + $0x178] sm:$0xff]
        %v758 = vld [vmem:[%s394] sm:$0x1]
        %v760 = vlaneseq
        %v761 = vshrl.u32 %v760, 7
        %v762 = vsub.s32 0, %v761
        %v763 = vrot.slane %v758, %v762
        %v765 = vld [vmem:[#allocation2] sm:$0xff]
        %s766 = smul.u32 %s29, 7
        %s767 = smul.u32 %s29, 56
        %s768 = sshra.s32 %s767, 3
        %s769 = sand.u32 %s767, 7
        %s770 = smul.u32 %s768, 3
        %s771 = smul.addr %s770, 8
        %s772 = scalar_lea.vmem [#allocation3], %s771
        %v773 = vld [vmem:[%s772] sm:$0xff]
        %v774 = vld [vmem:[%s772 + $0x8] sm:$0xff]
        %v775 = vld [vmem:[%s772 + $0x10] sm:$0xff]
        %776 = vmatprep.subr.mxu0 %v711
        %777 = vmatpush1.msra.mxu0 %v710
        %778 = vmatprep.subr.mxu0 %v714
        %779 = vmatpush1.msra.mxu0 %v713
        %780 = vmatprep.subr.mxu0 %v717
        %781 = vmatpush1.msra.mxu0 %v716
        %782 = vmatprep.subr.mxu0 %v720
        %783 = vmatpush1.msra.mxu0 %v719
        %784 = vmatprep.subr.mxu0 %v723
        %785 = vmatpush1.msra.mxu0 %v722
        %786 = vmatprep.subr.mxu0 %v726
        %787 = vmatpush1.msra.mxu0 %v725
        %788 = vmatprep.subr.mxu0 %v729
        %789 = vmatpush1.msra.mxu0 %v728
        %790 = vmatprep.subr.mxu0 %v732
        %791 = vmatpush1.msra.mxu0 %v731
        %792 = vmatprep.subr.mxu0 %v735
        %793 = vmatpush1.msra.mxu0 %v734
        %794 = vmatprep.subr.mxu0 %v738
        %795 = vmatpush1.msra.mxu0 %v737
        %796 = vmatprep.subr.mxu0 %v741
        %797 = vmatpush1.msra.mxu0 %v740
        %798 = vmatprep.subr.mxu0 %v744
        %799 = vmatpush1.msra.mxu0 %v743
        %800 = vmatprep.subr.mxu0 %v747
        %801 = vmatpush1.msra.mxu0 %v746
        %802 = vmatprep.subr.mxu0 %v750
        %803 = vmatpush1.msra.mxu0 %v749
        %804 = vmatprep.subr.mxu0 %v753
        %805 = vmatpush1.msra.mxu0 %v752
        %806 = vmatprep.subr.mxu0 %v756
        %807 = vmatpush1.msra.mxu0 %v755
        %808 = vmatprep.subr.mxu0 0.0
        %809 = vmatpush1.msra.mxu0 0.0
        %810 = vmatprep.subr.mxu0 0.0
        %811 = vmatpush1.msra.mxu0 0.0
        %812 = vmatprep.subr.mxu0 0.0
        %813 = vmatpush1.msra.mxu0 0.0
        %814 = vmatprep.subr.mxu0 0.0
        %815 = vmatpush1.msra.mxu0 0.0
        %816 = vmatprep.subr.mxu0 0.0
        %817 = vmatpush1.msra.mxu0 0.0
        %818 = vmatprep.subr.mxu0 0.0
        %819 = vmatpush1.msra.mxu0 0.0
        %820 = vmatprep.subr.mxu0 0.0
        %821 = vmatpush1.msra.mxu0 0.0
        %822 = vmatprep.subr.mxu0 0.0
        %823 = vmatpush1.msra.mxu0 0.0
        %824 = vmatprep.subr.mxu0 0.0
        %825 = vmatpush1.msra.mxu0 0.0
        %826 = vmatprep.subr.mxu0 0.0
        %827 = vmatpush1.msra.mxu0 0.0
        %828 = vmatprep.subr.mxu0 0.0
        %829 = vmatpush1.msra.mxu0 0.0
        %830 = vmatprep.subr.mxu0 0.0
        %831 = vmatpush1.msra.mxu0 0.0
        %832 = vmatprep.subr.mxu0 0.0
        %833 = vmatpush1.msra.mxu0 0.0
        %834 = vmatprep.subr.mxu0 0.0
        %835 = vmatpush1.msra.mxu0 0.0
        %836 = vmatprep.subr.mxu0 0.0
        %837 = vmatpush1.msra.mxu0 0.0
        %838 = vmatprep.subr.mxu0 0.0
        %839 = vmatpush1.msra.mxu0 0.0
        %840 = vmatprep.mubr.f32.mxu0 0.0
        %841 = vmatmul.mubr.f32.gmra.mrb[0].mxu0 %v765
        %v842 = vpop.f32.mrb[0].mxu0
        %v843 = vadd.f32 0.0, %v842
        %v844 = vpop.f32.mrb[0].mxu0
        %v845 = vadd.f32 0.0, %v844
        %846 = vdwg.mxu0
        %847 = vmatprep.subr.mxu0 0.0
        %848 = vmatpush1.msra.mxu0 %v712
        %849 = vmatprep.subr.mxu0 0.0
        %850 = vmatpush1.msra.mxu0 %v715
        %851 = vmatprep.subr.mxu0 0.0
        %852 = vmatpush1.msra.mxu0 %v718
        %853 = vmatprep.subr.mxu0 0.0
        %854 = vmatpush1.msra.mxu0 %v721
        %855 = vmatprep.subr.mxu0 0.0
        %856 = vmatpush1.msra.mxu0 %v724
        %857 = vmatprep.subr.mxu0 0.0
        %858 = vmatpush1.msra.mxu0 %v727
        %859 = vmatprep.subr.mxu0 0.0
        %860 = vmatpush1.msra.mxu0 %v730
        %861 = vmatprep.subr.mxu0 0.0
        %862 = vmatpush1.msra.mxu0 %v733
        %863 = vmatprep.subr.mxu0 0.0
        %864 = vmatpush1.msra.mxu0 %v736
        %865 = vmatprep.subr.mxu0 0.0
        %866 = vmatpush1.msra.mxu0 %v739
        %867 = vmatprep.subr.mxu0 0.0
        %868 = vmatpush1.msra.mxu0 %v742
        %869 = vmatprep.subr.mxu0 0.0
        %870 = vmatpush1.msra.mxu0 %v745
        %871 = vmatprep.subr.mxu0 0.0
        %872 = vmatpush1.msra.mxu0 %v748
        %873 = vmatprep.subr.mxu0 0.0
        %874 = vmatpush1.msra.mxu0 %v751
        %875 = vmatprep.subr.mxu0 0.0
        %876 = vmatpush1.msra.mxu0 %v754
        %877 = vmatprep.subr.mxu0 0.0
        %878 = vmatpush1.msra.mxu0 %v757
        %879 = vmatprep.subr.mxu0 0.0
        %880 = vmatpush1.msra.mxu0 0.0
        %881 = vmatprep.subr.mxu0 0.0
        %882 = vmatpush1.msra.mxu0 0.0
        %883 = vmatprep.subr.mxu0 0.0
        %884 = vmatpush1.msra.mxu0 0.0
        %885 = vmatprep.subr.mxu0 0.0
        %886 = vmatpush1.msra.mxu0 0.0
        %887 = vmatprep.subr.mxu0 0.0
        %888 = vmatpush1.msra.mxu0 0.0
        %889 = vmatprep.subr.mxu0 0.0
        %890 = vmatpush1.msra.mxu0 0.0
        %891 = vmatprep.subr.mxu0 0.0
        %892 = vmatpush1.msra.mxu0 0.0
        %893 = vmatprep.subr.mxu0 0.0
        %894 = vmatpush1.msra.mxu0 0.0
        %895 = vmatprep.subr.mxu0 0.0
        %896 = vmatpush1.msra.mxu0 0.0
        %897 = vmatprep.subr.mxu0 0.0
        %898 = vmatpush1.msra.mxu0 0.0
        %899 = vmatprep.subr.mxu0 0.0
        %900 = vmatpush1.msra.mxu0 0.0
        %901 = vmatprep.subr.mxu0 0.0
        %902 = vmatpush1.msra.mxu0 0.0
        %903 = vmatprep.subr.mxu0 0.0
        %904 = vmatpush1.msra.mxu0 0.0
        %905 = vmatprep.subr.mxu0 0.0
        %906 = vmatpush1.msra.mxu0 0.0
        %907 = vmatprep.subr.mxu0 0.0
        %908 = vmatpush1.msra.mxu0 0.0
        %909 = vmatprep.subr.mxu0 0.0
        %910 = vmatpush1.msra.mxu0 0.0
        %911 = vmatprep.mubr.f32.mxu0 0.0
        %912 = vmatmul.mubr.f32.gmra.mrb[0].mxu0 %v765
        %v913 = vpop.f32.mrb[0].mxu0
        %v914 = vadd.f32 0.0, %v913
        %v915 = vpop.f32.mrb[0].mxu0
        %916 = vdwg.mxu0
        %v917 = vadd.f32 %v773, %v843
        %v918 = vxor.u32 %v917, 2147483648
        %v919 = vmul.f32 %v918, 1.442695
        %v920 = vpow.pop %v919
        %v921 = vadd.f32 %v920, 1.0
        %v922 = vrcp.pop %v921
        %v923 = vmul.f32 1.0, %v922
        %v924 = vadd.f32 %v774, %v845
        %v925 = vxor.u32 %v924, 2147483648
        %v926 = vmul.f32 %v925, 1.442695
        %v927 = vpow.pop %v926
        %v928 = vadd.f32 %v927, 1.0
        %v929 = vrcp.pop %v928
        %v930 = vmul.f32 1.0, %v929
        %v931 = vadd.f32 %v914, %v763
        %v932 = vmul.f32 %v923, %v931
        %v933 = vadd.f32 %v775, %v932
        %v934 = vtanh.pop %v933
        %v935 = vsub.f32 1.0, %v930
        %v936 = vmul.f32 %v935, %v934
        %v937 = vmul.f32 %v930, %v765
        %v938 = vadd.f32 %v936, %v937
        %s939 = smul.u32 %s766, 8
        %s940 = scalar_lea.vmem %s371, %s939 [#allocation9]
        %941 = vst [vmem:[%s940] sm:$0xff] %v938
        %s942 = smul.u32 %s29, 5
        %s943 = sadd.s32 %s942, 1
        %s944 = smul.u32 %s943, 8
        %s945 = sshra.s32 %s944, 3
        %s946 = sand.u32 %s944, 7
        %s947 = smul.u32 %s945, 3
        %s948 = smul.addr %s947, 8
        %s949 = scalar_lea.vmem [#allocation3], %s948
        %v950 = vld [vmem:[%s949] sm:$0xff]
        %v951 = vld [vmem:[%s949 + $0x8] sm:$0xff]
        %v952 = vld [vmem:[%s949 + $0x10] sm:$0xff]
        %953 = vmatprep.subr.mxu0 %v711
        %954 = vmatpush1.msra.mxu0 %v710
        %955 = vmatprep.subr.mxu0 %v714
        %956 = vmatpush1.msra.mxu0 %v713
        %957 = vmatprep.subr.mxu0 %v717
        %958 = vmatpush1.msra.mxu0 %v716
        %959 = vmatprep.subr.mxu0 %v720
        %960 = vmatpush1.msra.mxu0 %v719
        %961 = vmatprep.subr.mxu0 %v723
        %962 = vmatpush1.msra.mxu0 %v722
        %963 = vmatprep.subr.mxu0 %v726
        %964 = vmatpush1.msra.mxu0 %v725
        %965 = vmatprep.subr.mxu0 %v729
        %966 = vmatpush1.msra.mxu0 %v728
        %967 = vmatprep.subr.mxu0 %v732
        %968 = vmatpush1.msra.mxu0 %v731
        %969 = vmatprep.subr.mxu0 %v735
        %970 = vmatpush1.msra.mxu0 %v734
        %971 = vmatprep.subr.mxu0 %v738
        %972 = vmatpush1.msra.mxu0 %v737
        %973 = vmatprep.subr.mxu0 %v741
        %974 = vmatpush1.msra.mxu0 %v740
        %975 = vmatprep.subr.mxu0 %v744
        %976 = vmatpush1.msra.mxu0 %v743
        %977 = vmatprep.subr.mxu0 %v747
        %978 = vmatpush1.msra.mxu0 %v746
        %979 = vmatprep.subr.mxu0 %v750
        %980 = vmatpush1.msra.mxu0 %v749
        %981 = vmatprep.subr.mxu0 %v753
        %982 = vmatpush1.msra.mxu0 %v752
        %983 = vmatprep.subr.mxu0 %v756
        %984 = vmatpush1.msra.mxu0 %v755
        %985 = vmatprep.subr.mxu0 0.0
        %986 = vmatpush1.msra.mxu0 0.0
        %987 = vmatprep.subr.mxu0 0.0
        %988 = vmatpush1.msra.mxu0 0.0
        %989 = vmatprep.subr.mxu0 0.0
        %990 = vmatpush1.msra.mxu0 0.0
        %991 = vmatprep.subr.mxu0 0.0
        %992 = vmatpush1.msra.mxu0 0.0
        %993 = vmatprep.subr.mxu0 0.0
        %994 = vmatpush1.msra.mxu0 0.0
        %995 = vmatprep.subr.mxu0 0.0
        %996 = vmatpush1.msra.mxu0 0.0
        %997 = vmatprep.subr.mxu0 0.0
        %998 = vmatpush1.msra.mxu0 0.0
        %999 = vmatprep.subr.mxu0 0.0
        %1000 = vmatpush1.msra.mxu0 0.0
        %1001 = vmatprep.subr.mxu0 0.0
        %1002 = vmatpush1.msra.mxu0 0.0
        %1003 = vmatprep.subr.mxu0 0.0
        %1004 = vmatpush1.msra.mxu0 0.0
        %1005 = vmatprep.subr.mxu0 0.0
        %1006 = vmatpush1.msra.mxu0 0.0
        %1007 = vmatprep.subr.mxu0 0.0
        %1008 = vmatpush1.msra.mxu0 0.0
        %1009 = vmatprep.subr.mxu0 0.0
        %1010 = vmatpush1.msra.mxu0 0.0
        %1011 = vmatprep.subr.mxu0 0.0
        %1012 = vmatpush1.msra.mxu0 0.0
        %1013 = vmatprep.subr.mxu0 0.0
        %1014 = vmatpush1.msra.mxu0 0.0
        %1015 = vmatprep.subr.mxu0 0.0
        %1016 = vmatpush1.msra.mxu0 0.0
        %1017 = vmatprep.mubr.f32.mxu0 0.0
        %1018 = vmatmul.mubr.f32.gmra.mrb[0].mxu0 %v938
        %v1019 = vpop.f32.mrb[0].mxu0
        %v1020 = vadd.f32 0.0, %v1019
        %v1021 = vpop.f32.mrb[0].mxu0
        %v1022 = vadd.f32 0.0, %v1021
        %1023 = vdwg.mxu0
        %1024 = vmatprep.subr.mxu0 0.0
        %1025 = vmatpush1.msra.mxu0 %v712
        %1026 = vmatprep.subr.mxu0 0.0
        %1027 = vmatpush1.msra.mxu0 %v715
        %1028 = vmatprep.subr.mxu0 0.0
        %1029 = vmatpush1.msra.mxu0 %v718
        %1030 = vmatprep.subr.mxu0 0.0
        %1031 = vmatpush1.msra.mxu0 %v721
        %1032 = vmatprep.subr.mxu0 0.0
        %1033 = vmatpush1.msra.mxu0 %v724
        %1034 = vmatprep.subr.mxu0 0.0
        %1035 = vmatpush1.msra.mxu0 %v727
        %1036 = vmatprep.subr.mxu0 0.0
        %1037 = vmatpush1.msra.mxu0 %v730
        %1038 = vmatprep.subr.mxu0 0.0
        %1039 = vmatpush1.msra.mxu0 %v733
        %1040 = vmatprep.subr.mxu0 0.0
        %1041 = vmatpush1.msra.mxu0 %v736
        %1042 = vmatprep.subr.mxu0 0.0
        %1043 = vmatpush1.msra.mxu0 %v739
        %1044 = vmatprep.subr.mxu0 0.0
        %1045 = vmatpush1.msra.mxu0 %v742
        %1046 = vmatprep.subr.mxu0 0.0
        %1047 = vmatpush1.msra.mxu0 %v745
        %1048 = vmatprep.subr.mxu0 0.0
        %1049 = vmatpush1.msra.mxu0 %v748
        %1050 = vmatprep.subr.mxu0 0.0
        %1051 = vmatpush1.msra.mxu0 %v751
        %1052 = vmatprep.subr.mxu0 0.0
        %1053 = vmatpush1.msra.mxu0 %v754
        %1054 = vmatprep.subr.mxu0 0.0
        %1055 = vmatpush1.msra.mxu0 %v757
        %1056 = vmatprep.subr.mxu0 0.0
        %1057 = vmatpush1.msra.mxu0 0.0
        %1058 = vmatprep.subr.mxu0 0.0
        %1059 = vmatpush1.msra.mxu0 0.0
        %1060 = vmatprep.subr.mxu0 0.0
        %1061 = vmatpush1.msra.mxu0 0.0
        %1062 = vmatprep.subr.mxu0 0.0
        %1063 = vmatpush1.msra.mxu0 0.0
        %1064 = vmatprep.subr.mxu0 0.0
        %1065 = vmatpush1.msra.mxu0 0.0
        %1066 = vmatprep.subr.mxu0 0.0
        %1067 = vmatpush1.msra.mxu0 0.0
        %1068 = vmatprep.subr.mxu0 0.0
        %1069 = vmatpush1.msra.mxu0 0.0
        %1070 = vmatprep.subr.mxu0 0.0
        %1071 = vmatpush1.msra.mxu0 0.0
        %1072 = vmatprep.subr.mxu0 0.0
        %1073 = vmatpush1.msra.mxu0 0.0
        %1074 = vmatprep.subr.mxu0 0.0
        %1075 = vmatpush1.msra.mxu0 0.0
        %1076 = vmatprep.subr.mxu0 0.0
        %1077 = vmatpush1.msra.mxu0 0.0
        %1078 = vmatprep.subr.mxu0 0.0
        %1079 = vmatpush1.msra.mxu0 0.0
        %1080 = vmatprep.subr.mxu0 0.0
        %1081 = vmatpush1.msra.mxu0 0.0
        %1082 = vmatprep.subr.mxu0 0.0
        %1083 = vmatpush1.msra.mxu0 0.0
        %1084 = vmatprep.subr.mxu0 0.0
        %1085 = vmatpush1.msra.mxu0 0.0
        %1086 = vmatprep.subr.mxu0 0.0
        %1087 = vmatpush1.msra.mxu0 0.0
        %1088 = vmatprep.mubr.f32.mxu0 0.0
        %1089 = vmatmul.mubr.f32.gmra.mrb[0].mxu0 %v938
        %v1090 = vpop.f32.mrb[0].mxu0
        %v1091 = vadd.f32 0.0, %v1090
        %v1092 = vpop.f32.mrb[0].mxu0
        %1093 = vdwg.mxu0
        %v1094 = vadd.f32 %v950, %v1020
        %v1095 = vxor.u32 %v1094, 2147483648
        %v1096 = vmul.f32 %v1095, 1.442695
        %v1097 = vpow.pop %v1096
        %v1098 = vadd.f32 %v1097, 1.0
        %v1099 = vrcp.pop %v1098
        %v1100 = vmul.f32 1.0, %v1099
        %v1101 = vadd.f32 %v951, %v1022
        %v1102 = vxor.u32 %v1101, 2147483648
        %v1103 = vmul.f32 %v1102, 1.442695
        %v1104 = vpow.pop %v1103
        %v1105 = vadd.f32 %v1104, 1.0
        %v1106 = vrcp.pop %v1105
        %v1107 = vmul.f32 1.0, %v1106
        %v1108 = vadd.f32 %v1091, %v763
        %v1109 = vmul.f32 %v1100, %v1108
        %v1110 = vadd.f32 %v952, %v1109
        %v1111 = vtanh.pop %v1110
        %v1112 = vsub.f32 1.0, %v1107
        %v1113 = vmul.f32 %v1112, %v1111
        %v1114 = vmul.f32 %v1107, %v938
        %v1115 = vadd.f32 %v1113, %v1114
        %s1116 = scalar_lea.vmem %s371, %s944 [#allocation9]
        %1117 = vst [vmem:[%s1116] sm:$0xff] %v1115
        %s1118 = smul.u32 %s29, 3
        %s1119 = sadd.s32 %s1118, 2
        %s1120 = smul.u32 %s1119, 8
        %s1121 = sshra.s32 %s1120, 3
        %s1122 = sand.u32 %s1120, 7
        %s1123 = smul.u32 %s1121, 3
        %s1124 = smul.addr %s1123, 8
        %s1125 = scalar_lea.vmem [#allocation3], %s1124
        %v1126 = vld [vmem:[%s1125] sm:$0xff]
        %v1127 = vld [vmem:[%s1125 + $0x8] sm:$0xff]
        %v1128 = vld [vmem:[%s1125 + $0x10] sm:$0xff]
        %1129 = vmatprep.subr.mxu0 %v711
        %1130 = vmatpush1.msra.mxu0 %v710
        %1131 = vmatprep.subr.mxu0 %v714
        %1132 = vmatpush1.msra.mxu0 %v713
        %1133 = vmatprep.subr.mxu0 %v717
        %1134 = vmatpush1.msra.mxu0 %v716
        %1135 = vmatprep.subr.mxu0 %v720
        %1136 = vmatpush1.msra.mxu0 %v719
        %1137 = vmatprep.subr.mxu0 %v723
        %1138 = vmatpush1.msra.mxu0 %v722
        %1139 = vmatprep.subr.mxu0 %v726
        %1140 = vmatpush1.msra.mxu0 %v725
        %1141 = vmatprep.subr.mxu0 %v729
        %1142 = vmatpush1.msra.mxu0 %v728
        %1143 = vmatprep.subr.mxu0 %v732
        %1144 = vmatpush1.msra.mxu0 %v731
        %1145 = vmatprep.subr.mxu0 %v735
        %1146 = vmatpush1.msra.mxu0 %v734
        %1147 = vmatprep.subr.mxu0 %v738
        %1148 = vmatpush1.msra.mxu0 %v737
        %1149 = vmatprep.subr.mxu0 %v741
        %1150 = vmatpush1.msra.mxu0 %v740
        %1151 = vmatprep.subr.mxu0 %v744
        %1152 = vmatpush1.msra.mxu0 %v743
        %1153 = vmatprep.subr.mxu0 %v747
        %1154 = vmatpush1.msra.mxu0 %v746
        %1155 = vmatprep.subr.mxu0 %v750
        %1156 = vmatpush1.msra.mxu0 %v749
        %1157 = vmatprep.subr.mxu0 %v753
        %1158 = vmatpush1.msra.mxu0 %v752
        %1159 = vmatprep.subr.mxu0 %v756
        %1160 = vmatpush1.msra.mxu0 %v755
        %1161 = vmatprep.subr.mxu0 0.0
        %1162 = vmatpush1.msra.mxu0 0.0
        %1163 = vmatprep.subr.mxu0 0.0
        %1164 = vmatpush1.msra.mxu0 0.0
        %1165 = vmatprep.subr.mxu0 0.0
        %1166 = vmatpush1.msra.mxu0 0.0
        %1167 = vmatprep.subr.mxu0 0.0
        %1168 = vmatpush1.msra.mxu0 0.0
        %1169 = vmatprep.subr.mxu0 0.0
        %1170 = vmatpush1.msra.mxu0 0.0
        %1171 = vmatprep.subr.mxu0 0.0
        %1172 = vmatpush1.msra.mxu0 0.0
        %1173 = vmatprep.subr.mxu0 0.0
        %1174 = vmatpush1.msra.mxu0 0.0
        %1175 = vmatprep.subr.mxu0 0.0
        %1176 = vmatpush1.msra.mxu0 0.0
        %1177 = vmatprep.subr.mxu0 0.0
        %1178 = vmatpush1.msra.mxu0 0.0
        %1179 = vmatprep.subr.mxu0 0.0
        %1180 = vmatpush1.msra.mxu0 0.0
        %1181 = vmatprep.subr.mxu0 0.0
        %1182 = vmatpush1.msra.mxu0 0.0
        %1183 = vmatprep.subr.mxu0 0.0
        %1184 = vmatpush1.msra.mxu0 0.0
        %1185 = vmatprep.subr.mxu0 0.0
        %1186 = vmatpush1.msra.mxu0 0.0
        %1187 = vmatprep.subr.mxu0 0.0
        %1188 = vmatpush1.msra.mxu0 0.0
        %1189 = vmatprep.subr.mxu0 0.0
        %1190 = vmatpush1.msra.mxu0 0.0
        %1191 = vmatprep.subr.mxu0 0.0
        %1192 = vmatpush1.msra.mxu0 0.0
        %1193 = vmatprep.mubr.f32.mxu0 0.0
        %1194 = vmatmul.mubr.f32.gmra.mrb[0].mxu0 %v1115
        %v1195 = vpop.f32.mrb[0].mxu0
        %v1196 = vadd.f32 0.0, %v1195
        %v1197 = vpop.f32.mrb[0].mxu0
        %v1198 = vadd.f32 0.0, %v1197
        %1199 = vdwg.mxu0
        %1200 = vmatprep.subr.mxu0 0.0
        %1201 = vmatpush1.msra.mxu0 %v712
        %1202 = vmatprep.subr.mxu0 0.0
        %1203 = vmatpush1.msra.mxu0 %v715
        %1204 = vmatprep.subr.mxu0 0.0
        %1205 = vmatpush1.msra.mxu0 %v718
        %1206 = vmatprep.subr.mxu0 0.0
        %1207 = vmatpush1.msra.mxu0 %v721
        %1208 = vmatprep.subr.mxu0 0.0
        %1209 = vmatpush1.msra.mxu0 %v724
        %1210 = vmatprep.subr.mxu0 0.0
        %1211 = vmatpush1.msra.mxu0 %v727
        %1212 = vmatprep.subr.mxu0 0.0
        %1213 = vmatpush1.msra.mxu0 %v730
        %1214 = vmatprep.subr.mxu0 0.0
        %1215 = vmatpush1.msra.mxu0 %v733
        %1216 = vmatprep.subr.mxu0 0.0
        %1217 = vmatpush1.msra.mxu0 %v736
        %1218 = vmatprep.subr.mxu0 0.0
        %1219 = vmatpush1.msra.mxu0 %v739
        %1220 = vmatprep.subr.mxu0 0.0
        %1221 = vmatpush1.msra.mxu0 %v742
        %1222 = vmatprep.subr.mxu0 0.0
        %1223 = vmatpush1.msra.mxu0 %v745
        %1224 = vmatprep.subr.mxu0 0.0
        %1225 = vmatpush1.msra.mxu0 %v748
        %1226 = vmatprep.subr.mxu0 0.0
        %1227 = vmatpush1.msra.mxu0 %v751
        %1228 = vmatprep.subr.mxu0 0.0
        %1229 = vmatpush1.msra.mxu0 %v754
        %1230 = vmatprep.subr.mxu0 0.0
        %1231 = vmatpush1.msra.mxu0 %v757
        %1232 = vmatprep.subr.mxu0 0.0
        %1233 = vmatpush1.msra.mxu0 0.0
        %1234 = vmatprep.subr.mxu0 0.0
        %1235 = vmatpush1.msra.mxu0 0.0
        %1236 = vmatprep.subr.mxu0 0.0
        %1237 = vmatpush1.msra.mxu0 0.0
        %1238 = vmatprep.subr.mxu0 0.0
        %1239 = vmatpush1.msra.mxu0 0.0
        %1240 = vmatprep.subr.mxu0 0.0
        %1241 = vmatpush1.msra.mxu0 0.0
        %1242 = vmatprep.subr.mxu0 0.0
        %1243 = vmatpush1.msra.mxu0 0.0
        %1244 = vmatprep.subr.mxu0 0.0
        %1245 = vmatpush1.msra.mxu0 0.0
        %1246 = vmatprep.subr.mxu0 0.0
        %1247 = vmatpush1.msra.mxu0 0.0
        %1248 = vmatprep.subr.mxu0 0.0
        %1249 = vmatpush1.msra.mxu0 0.0
        %1250 = vmatprep.subr.mxu0 0.0
        %1251 = vmatpush1.msra.mxu0 0.0
        %1252 = vmatprep.subr.mxu0 0.0
        %1253 = vmatpush1.msra.mxu0 0.0
        %1254 = vmatprep.subr.mxu0 0.0
        %1255 = vmatpush1.msra.mxu0 0.0
        %1256 = vmatprep.subr.mxu0 0.0
        %1257 = vmatpush1.msra.mxu0 0.0
        %1258 = vmatprep.subr.mxu0 0.0
        %1259 = vmatpush1.msra.mxu0 0.0
        %1260 = vmatprep.subr.mxu0 0.0
        %1261 = vmatpush1.msra.mxu0 0.0
        %1262 = vmatprep.subr.mxu0 0.0
        %1263 = vmatpush1.msra.mxu0 0.0
        %1264 = vmatprep.mubr.f32.mxu0 0.0
        %1265 = vmatmul.mubr.f32.gmra.mrb[0].mxu0 %v1115
        %v1266 = vpop.f32.mrb[0].mxu0
        %v1267 = vadd.f32 0.0, %v1266
        %v1268 = vpop.f32.mrb[0].mxu0
        %1269 = vdwg.mxu0
        %v1270 = vadd.f32 %v1126, %v1196
        %v1271 = vxor.u32 %v1270, 2147483648
        %v1272 = vmul.f32 %v1271, 1.442695
        %v1273 = vpow.pop %v1272
        %v1274 = vadd.f32 %v1273, 1.0
        %v1275 = vrcp.pop %v1274
        %v1276 = vmul.f32 1.0, %v1275
        %v1277 = vadd.f32 %v1127, %v1198
        %v1278 = vxor.u32 %v1277, 2147483648
        %v1279 = vmul.f32 %v1278, 1.442695
        %v1280 = vpow.pop %v1279
        %v1281 = vadd.f32 %v1280, 1.0
        %v1282 = vrcp.pop %v1281
        %v1283 = vmul.f32 1.0, %v1282
        %v1284 = vadd.f32 %v1267, %v763
        %v1285 = vmul.f32 %v1276, %v1284
        %v1286 = vadd.f32 %v1128, %v1285
        %v1287 = vtanh.pop %v1286
        %v1288 = vsub.f32 1.0, %v1283
        %v1289 = vmul.f32 %v1288, %v1287
        %v1290 = vmul.f32 %v1283, %v1115
        %v1291 = vadd.f32 %v1289, %v1290
        %s1292 = scalar_lea.vmem %s371, %s1120 [#allocation9]
        %1293 = vst [vmem:[%s1292] sm:$0xff] %v1291
        %s1294 = sadd.s32 %s29, 3
        %s1295 = smul.u32 %s1294, 8
        %s1296 = sshra.s32 %s1295, 3
        %s1297 = sand.u32 %s1295, 7
        %s1298 = smul.u32 %s1296, 3
        %s1299 = smul.addr %s1298, 8
        %s1300 = scalar_lea.vmem [#allocation3], %s1299
        %v1301 = vld [vmem:[%s1300] sm:$0xff]
        %v1302 = vld [vmem:[%s1300 + $0x8] sm:$0xff]
        %v1303 = vld [vmem:[%s1300 + $0x10] sm:$0xff]
        %1304 = vmatprep.subr.mxu0 %v711
        %1305 = vmatpush1.msra.mxu0 %v710
        %1306 = vmatprep.subr.mxu0 %v714
        %1307 = vmatpush1.msra.mxu0 %v713
        %1308 = vmatprep.subr.mxu0 %v717
        %1309 = vmatpush1.msra.mxu0 %v716
        %1310 = vmatprep.subr.mxu0 %v720
        %1311 = vmatpush1.msra.mxu0 %v719
        %1312 = vmatprep.subr.mxu0 %v723
        %1313 = vmatpush1.msra.mxu0 %v722
        %1314 = vmatprep.subr.mxu0 %v726
        %1315 = vmatpush1.msra.mxu0 %v725
        %1316 = vmatprep.subr.mxu0 %v729
        %1317 = vmatpush1.msra.mxu0 %v728
        %1318 = vmatprep.subr.mxu0 %v732
        %1319 = vmatpush1.msra.mxu0 %v731
        %1320 = vmatprep.subr.mxu0 %v735
        %1321 = vmatpush1.msra.mxu0 %v734
        %1322 = vmatprep.subr.mxu0 %v738
        %1323 = vmatpush1.msra.mxu0 %v737
        %1324 = vmatprep.subr.mxu0 %v741
        %1325 = vmatpush1.msra.mxu0 %v740
        %1326 = vmatprep.subr.mxu0 %v744
        %1327 = vmatpush1.msra.mxu0 %v743
        %1328 = vmatprep.subr.mxu0 %v747
        %1329 = vmatpush1.msra.mxu0 %v746
        %1330 = vmatprep.subr.mxu0 %v750
        %1331 = vmatpush1.msra.mxu0 %v749
        %1332 = vmatprep.subr.mxu0 %v753
        %1333 = vmatpush1.msra.mxu0 %v752
        %1334 = vmatprep.subr.mxu0 %v756
        %1335 = vmatpush1.msra.mxu0 %v755
        %1336 = vmatprep.subr.mxu0 0.0
        %1337 = vmatpush1.msra.mxu0 0.0
        %1338 = vmatprep.subr.mxu0 0.0
        %1339 = vmatpush1.msra.mxu0 0.0
        %1340 = vmatprep.subr.mxu0 0.0
        %1341 = vmatpush1.msra.mxu0 0.0
        %1342 = vmatprep.subr.mxu0 0.0
        %1343 = vmatpush1.msra.mxu0 0.0
        %1344 = vmatprep.subr.mxu0 0.0
        %1345 = vmatpush1.msra.mxu0 0.0
        %1346 = vmatprep.subr.mxu0 0.0
        %1347 = vmatpush1.msra.mxu0 0.0
        %1348 = vmatprep.subr.mxu0 0.0
        %1349 = vmatpush1.msra.mxu0 0.0
        %1350 = vmatprep.subr.mxu0 0.0
        %1351 = vmatpush1.msra.mxu0 0.0
        %1352 = vmatprep.subr.mxu0 0.0
        %1353 = vmatpush1.msra.mxu0 0.0
        %1354 = vmatprep.subr.mxu0 0.0
        %1355 = vmatpush1.msra.mxu0 0.0
        %1356 = vmatprep.subr.mxu0 0.0
        %1357 = vmatpush1.msra.mxu0 0.0
        %1358 = vmatprep.subr.mxu0 0.0
        %1359 = vmatpush1.msra.mxu0 0.0
        %1360 = vmatprep.subr.mxu0 0.0
        %1361 = vmatpush1.msra.mxu0 0.0
        %1362 = vmatprep.subr.mxu0 0.0
        %1363 = vmatpush1.msra.mxu0 0.0
        %1364 = vmatprep.subr.mxu0 0.0
        %1365 = vmatpush1.msra.mxu0 0.0
        %1366 = vmatprep.subr.mxu0 0.0
        %1367 = vmatpush1.msra.mxu0 0.0
        %1368 = vmatprep.mubr.f32.mxu0 0.0
        %1369 = vmatmul.mubr.f32.gmra.mrb[0].mxu0 %v1291
        %v1370 = vpop.f32.mrb[0].mxu0
        %v1371 = vadd.f32 0.0, %v1370
        %v1372 = vpop.f32.mrb[0].mxu0
        %v1373 = vadd.f32 0.0, %v1372
        %1374 = vdwg.mxu0
        %1375 = vmatprep.subr.mxu0 0.0
        %1376 = vmatpush1.msra.mxu0 %v712
        %1377 = vmatprep.subr.mxu0 0.0
        %1378 = vmatpush1.msra.mxu0 %v715
        %1379 = vmatprep.subr.mxu0 0.0
        %1380 = vmatpush1.msra.mxu0 %v718
        %1381 = vmatprep.subr.mxu0 0.0
        %1382 = vmatpush1.msra.mxu0 %v721
        %1383 = vmatprep.subr.mxu0 0.0
        %1384 = vmatpush1.msra.mxu0 %v724
        %1385 = vmatprep.subr.mxu0 0.0
        %1386 = vmatpush1.msra.mxu0 %v727
        %1387 = vmatprep.subr.mxu0 0.0
        %1388 = vmatpush1.msra.mxu0 %v730
        %1389 = vmatprep.subr.mxu0 0.0
        %1390 = vmatpush1.msra.mxu0 %v733
        %1391 = vmatprep.subr.mxu0 0.0
        %1392 = vmatpush1.msra.mxu0 %v736
        %1393 = vmatprep.subr.mxu0 0.0
        %1394 = vmatpush1.msra.mxu0 %v739
        %1395 = vmatprep.subr.mxu0 0.0
        %1396 = vmatpush1.msra.mxu0 %v742
        %1397 = vmatprep.subr.mxu0 0.0
        %1398 = vmatpush1.msra.mxu0 %v745
        %1399 = vmatprep.subr.mxu0 0.0
        %1400 = vmatpush1.msra.mxu0 %v748
        %1401 = vmatprep.subr.mxu0 0.0
        %1402 = vmatpush1.msra.mxu0 %v751
        %1403 = vmatprep.subr.mxu0 0.0
        %1404 = vmatpush1.msra.mxu0 %v754
        %1405 = vmatprep.subr.mxu0 0.0
        %1406 = vmatpush1.msra.mxu0 %v757
        %1407 = vmatprep.subr.mxu0 0.0
        %1408 = vmatpush1.msra.mxu0 0.0
        %1409 = vmatprep.subr.mxu0 0.0
        %1410 = vmatpush1.msra.mxu0 0.0
        %1411 = vmatprep.subr.mxu0 0.0
        %1412 = vmatpush1.msra.mxu0 0.0
        %1413 = vmatprep.subr.mxu0 0.0
        %1414 = vmatpush1.msra.mxu0 0.0
        %1415 = vmatprep.subr.mxu0 0.0
        %1416 = vmatpush1.msra.mxu0 0.0
        %1417 = vmatprep.subr.mxu0 0.0
        %1418 = vmatpush1.msra.mxu0 0.0
        %1419 = vmatprep.subr.mxu0 0.0
        %1420 = vmatpush1.msra.mxu0 0.0
        %1421 = vmatprep.subr.mxu0 0.0
        %1422 = vmatpush1.msra.mxu0 0.0
        %1423 = vmatprep.subr.mxu0 0.0
        %1424 = vmatpush1.msra.mxu0 0.0
        %1425 = vmatprep.subr.mxu0 0.0
        %1426 = vmatpush1.msra.mxu0 0.0
        %1427 = vmatprep.subr.mxu0 0.0
        %1428 = vmatpush1.msra.mxu0 0.0
        %1429 = vmatprep.subr.mxu0 0.0
        %1430 = vmatpush1.msra.mxu0 0.0
        %1431 = vmatprep.subr.mxu0 0.0
        %1432 = vmatpush1.msra.mxu0 0.0
        %1433 = vmatprep.subr.mxu0 0.0
        %1434 = vmatpush1.msra.mxu0 0.0
        %1435 = vmatprep.subr.mxu0 0.0
        %1436 = vmatpush1.msra.mxu0 0.0
        %1437 = vmatprep.subr.mxu0 0.0
        %1438 = vmatpush1.msra.mxu0 0.0
        %1439 = vmatprep.mubr.f32.mxu0 0.0
        %1440 = vmatmul.mubr.f32.gmra.mrb[0].mxu0 %v1291
        %v1441 = vpop.f32.mrb[0].mxu0
        %v1442 = vadd.f32 0.0, %v1441
        %v1443 = vpop.f32.mrb[0].mxu0
        %1444 = vdwg.mxu0
        %v1445 = vadd.f32 %v1301, %v1371
        %v1446 = vxor.u32 %v1445, 2147483648
        %v1447 = vmul.f32 %v1446, 1.442695
        %v1448 = vpow.pop %v1447
        %v1449 = vadd.f32 %v1448, 1.0
        %v1450 = vrcp.pop %v1449
        %v1451 = vmul.f32 1.0, %v1450
        %v1452 = vadd.f32 %v1302, %v1373
        %v1453 = vxor.u32 %v1452, 2147483648
        %v1454 = vmul.f32 %v1453, 1.442695
        %v1455 = vpow.pop %v1454
        %v1456 = vadd.f32 %v1455, 1.0
        %v1457 = vrcp.pop %v1456
        %v1458 = vmul.f32 1.0, %v1457
        %v1459 = vadd.f32 %v1442, %v763
        %v1460 = vmul.f32 %v1451, %v1459
        %v1461 = vadd.f32 %v1303, %v1460
        %v1462 = vtanh.pop %v1461
        %v1463 = vsub.f32 1.0, %v1458
        %v1464 = vmul.f32 %v1463, %v1462
        %v1465 = vmul.f32 %v1458, %v1291
        %v1466 = vadd.f32 %v1464, %v1465
        %s1467 = scalar_lea.vmem %s371, %s1295 [#allocation9]
        %1468 = vst [vmem:[%s1467] sm:$0xff] %v1466
        %s1469 = ssub.s32 4, %s29
        %s1470 = smul.u32 %s1469, 8
        %s1471 = sshra.s32 %s1470, 3
        %s1472 = sand.u32 %s1470, 7
        %s1473 = smul.u32 %s1471, 3
        %s1474 = smul.addr %s1473, 8
        %s1475 = scalar_lea.vmem [#allocation3], %s1474
        %v1476 = vld [vmem:[%s1475] sm:$0xff]
        %v1477 = vld [vmem:[%s1475 + $0x8] sm:$0xff]
        %v1478 = vld [vmem:[%s1475 + $0x10] sm:$0xff]
        %1479 = vmatprep.subr.mxu0 %v711
        %1480 = vmatpush1.msra.mxu0 %v710
        %1481 = vmatprep.subr.mxu0 %v714
        %1482 = vmatpush1.msra.mxu0 %v713
        %1483 = vmatprep.subr.mxu0 %v717
        %1484 = vmatpush1.msra.mxu0 %v716
        %1485 = vmatprep.subr.mxu0 %v720
        %1486 = vmatpush1.msra.mxu0 %v719
        %1487 = vmatprep.subr.mxu0 %v723
        %1488 = vmatpush1.msra.mxu0 %v722
        %1489 = vmatprep.subr.mxu0 %v726
        %1490 = vmatpush1.msra.mxu0 %v725
        %1491 = vmatprep.subr.mxu0 %v729
        %1492 = vmatpush1.msra.mxu0 %v728
        %1493 = vmatprep.subr.mxu0 %v732
        %1494 = vmatpush1.msra.mxu0 %v731
        %1495 = vmatprep.subr.mxu0 %v735
        %1496 = vmatpush1.msra.mxu0 %v734
        %1497 = vmatprep.subr.mxu0 %v738
        %1498 = vmatpush1.msra.mxu0 %v737
        %1499 = vmatprep.subr.mxu0 %v741
        %1500 = vmatpush1.msra.mxu0 %v740
        %1501 = vmatprep.subr.mxu0 %v744
        %1502 = vmatpush1.msra.mxu0 %v743
        %1503 = vmatprep.subr.mxu0 %v747
        %1504 = vmatpush1.msra.mxu0 %v746
        %1505 = vmatprep.subr.mxu0 %v750
        %1506 = vmatpush1.msra.mxu0 %v749
        %1507 = vmatprep.subr.mxu0 %v753
        %1508 = vmatpush1.msra.mxu0 %v752
        %1509 = vmatprep.subr.mxu0 %v756
        %1510 = vmatpush1.msra.mxu0 %v755
        %1511 = vmatprep.subr.mxu0 0.0
        %1512 = vmatpush1.msra.mxu0 0.0
        %1513 = vmatprep.subr.mxu0 0.0
        %1514 = vmatpush1.msra.mxu0 0.0
        %1515 = vmatprep.subr.mxu0 0.0
        %1516 = vmatpush1.msra.mxu0 0.0
        %1517 = vmatprep.subr.mxu0 0.0
        %1518 = vmatpush1.msra.mxu0 0.0
        %1519 = vmatprep.subr.mxu0 0.0
        %1520 = vmatpush1.msra.mxu0 0.0
        %1521 = vmatprep.subr.mxu0 0.0
        %1522 = vmatpush1.msra.mxu0 0.0
        %1523 = vmatprep.subr.mxu0 0.0
        %1524 = vmatpush1.msra.mxu0 0.0
        %1525 = vmatprep.subr.mxu0 0.0
        %1526 = vmatpush1.msra.mxu0 0.0
        %1527 = vmatprep.subr.mxu0 0.0
        %1528 = vmatpush1.msra.mxu0 0.0
        %1529 = vmatprep.subr.mxu0 0.0
        %1530 = vmatpush1.msra.mxu0 0.0
        %1531 = vmatprep.subr.mxu0 0.0
        %1532 = vmatpush1.msra.mxu0 0.0
        %1533 = vmatprep.subr.mxu0 0.0
        %1534 = vmatpush1.msra.mxu0 0.0
        %1535 = vmatprep.subr.mxu0 0.0
        %1536 = vmatpush1.msra.mxu0 0.0
        %1537 = vmatprep.subr.mxu0 0.0
        %1538 = vmatpush1.msra.mxu0 0.0
        %1539 = vmatprep.subr.mxu0 0.0
        %1540 = vmatpush1.msra.mxu0 0.0
        %1541 = vmatprep.subr.mxu0 0.0
        %1542 = vmatpush1.msra.mxu0 0.0
        %1543 = vmatprep.mubr.f32.mxu0 0.0
        %1544 = vmatmul.mubr.f32.gmra.mrb[0].mxu0 %v1466
        %v1545 = vpop.f32.mrb[0].mxu0
        %v1546 = vadd.f32 0.0, %v1545
        %v1547 = vpop.f32.mrb[0].mxu0
        %v1548 = vadd.f32 0.0, %v1547
        %1549 = vdwg.mxu0
        %1550 = vmatprep.subr.mxu0 0.0
        %1551 = vmatpush1.msra.mxu0 %v712
        %1552 = vmatprep.subr.mxu0 0.0
        %1553 = vmatpush1.msra.mxu0 %v715
        %1554 = vmatprep.subr.mxu0 0.0
        %1555 = vmatpush1.msra.mxu0 %v718
        %1556 = vmatprep.subr.mxu0 0.0
        %1557 = vmatpush1.msra.mxu0 %v721
        %1558 = vmatprep.subr.mxu0 0.0
        %1559 = vmatpush1.msra.mxu0 %v724
        %1560 = vmatprep.subr.mxu0 0.0
        %1561 = vmatpush1.msra.mxu0 %v727
        %1562 = vmatprep.subr.mxu0 0.0
        %1563 = vmatpush1.msra.mxu0 %v730
        %1564 = vmatprep.subr.mxu0 0.0
        %1565 = vmatpush1.msra.mxu0 %v733
        %1566 = vmatprep.subr.mxu0 0.0
        %1567 = vmatpush1.msra.mxu0 %v736
        %1568 = vmatprep.subr.mxu0 0.0
        %1569 = vmatpush1.msra.mxu0 %v739
        %1570 = vmatprep.subr.mxu0 0.0
        %1571 = vmatpush1.msra.mxu0 %v742
        %1572 = vmatprep.subr.mxu0 0.0
        %1573 = vmatpush1.msra.mxu0 %v745
        %1574 = vmatprep.subr.mxu0 0.0
        %1575 = vmatpush1.msra.mxu0 %v748
        %1576 = vmatprep.subr.mxu0 0.0
        %1577 = vmatpush1.msra.mxu0 %v751
        %1578 = vmatprep.subr.mxu0 0.0
        %1579 = vmatpush1.msra.mxu0 %v754
        %1580 = vmatprep.subr.mxu0 0.0
        %1581 = vmatpush1.msra.mxu0 %v757
        %1582 = vmatprep.subr.mxu0 0.0
        %1583 = vmatpush1.msra.mxu0 0.0
        %1584 = vmatprep.subr.mxu0 0.0
        %1585 = vmatpush1.msra.mxu0 0.0
        %1586 = vmatprep.subr.mxu0 0.0
        %1587 = vmatpush1.msra.mxu0 0.0
        %1588 = vmatprep.subr.mxu0 0.0
        %1589 = vmatpush1.msra.mxu0 0.0
        %1590 = vmatprep.subr.mxu0 0.0
        %1591 = vmatpush1.msra.mxu0 0.0
        %1592 = vmatprep.subr.mxu0 0.0
        %1593 = vmatpush1.msra.mxu0 0.0
        %1594 = vmatprep.subr.mxu0 0.0
        %1595 = vmatpush1.msra.mxu0 0.0
        %1596 = vmatprep.subr.mxu0 0.0
        %1597 = vmatpush1.msra.mxu0 0.0
        %1598 = vmatprep.subr.mxu0 0.0
        %1599 = vmatpush1.msra.mxu0 0.0
        %1600 = vmatprep.subr.mxu0 0.0
        %1601 = vmatpush1.msra.mxu0 0.0
        %1602 = vmatprep.subr.mxu0 0.0
        %1603 = vmatpush1.msra.mxu0 0.0
        %1604 = vmatprep.subr.mxu0 0.0
        %1605 = vmatpush1.msra.mxu0 0.0
        %1606 = vmatprep.subr.mxu0 0.0
        %1607 = vmatpush1.msra.mxu0 0.0
        %1608 = vmatprep.subr.mxu0 0.0
        %1609 = vmatpush1.msra.mxu0 0.0
        %1610 = vmatprep.subr.mxu0 0.0
        %1611 = vmatpush1.msra.mxu0 0.0
        %1612 = vmatprep.subr.mxu0 0.0
        %1613 = vmatpush1.msra.mxu0 0.0
        %1614 = vmatprep.mubr.f32.mxu0 0.0
        %1615 = vmatmul.mubr.f32.gmra.mrb[0].mxu0 %v1466
        %v1616 = vpop.f32.mrb[0].mxu0
        %v1617 = vadd.f32 0.0, %v1616
        %v1618 = vpop.f32.mrb[0].mxu0
        %1619 = vdwg.mxu0
        %v1620 = vadd.f32 %v1476, %v1546
        %v1621 = vxor.u32 %v1620, 2147483648
        %v1622 = vmul.f32 %v1621, 1.442695
        %v1623 = vpow.pop %v1622
        %v1624 = vadd.f32 %v1623, 1.0
        %v1625 = vrcp.pop %v1624
        %v1626 = vmul.f32 1.0, %v1625
        %v1627 = vadd.f32 %v1477, %v1548
        %v1628 = vxor.u32 %v1627, 2147483648
        %v1629 = vmul.f32 %v1628, 1.442695
        %v1630 = vpow.pop %v1629
        %v1631 = vadd.f32 %v1630, 1.0
        %v1632 = vrcp.pop %v1631
        %v1633 = vmul.f32 1.0, %v1632
        %v1634 = vadd.f32 %v1617, %v763
        %v1635 = vmul.f32 %v1626, %v1634
        %v1636 = vadd.f32 %v1478, %v1635
        %v1637 = vtanh.pop %v1636
        %v1638 = vsub.f32 1.0, %v1633
        %v1639 = vmul.f32 %v1638, %v1637
        %v1640 = vmul.f32 %v1633, %v1466
        %v1641 = vadd.f32 %v1639, %v1640
        %s1642 = scalar_lea.vmem %s371, %s1470 [#allocation9]
        %1643 = vst [vmem:[%s1642] sm:$0xff] %v1641
        %s1644 = smul.u32 %s29, 4294967293
        %s1645 = sadd.s32 %s1644, 5
        %s1646 = smul.u32 %s1645, 8
        %s1647 = sshra.s32 %s1646, 3
        %s1648 = sand.u32 %s1646, 7
        %s1649 = smul.u32 %s1647, 3
        %s1650 = smul.addr %s1649, 8
        %s1651 = scalar_lea.vmem [#allocation3], %s1650
        %v1652 = vld [vmem:[%s1651] sm:$0xff]
        %v1653 = vld [vmem:[%s1651 + $0x8] sm:$0xff]
        %v1654 = vld [vmem:[%s1651 + $0x10] sm:$0xff]
        %1655 = vmatprep.subr.mxu0 %v711
        %1656 = vmatpush1.msra.mxu0 %v710
        %1657 = vmatprep.subr.mxu0 %v714
        %1658 = vmatpush1.msra.mxu0 %v713
        %1659 = vmatprep.subr.mxu0 %v717
        %1660 = vmatpush1.msra.mxu0 %v716
        %1661 = vmatprep.subr.mxu0 %v720
        %1662 = vmatpush1.msra.mxu0 %v719
        %1663 = vmatprep.subr.mxu0 %v723
        %1664 = vmatpush1.msra.mxu0 %v722
        %1665 = vmatprep.subr.mxu0 %v726
        %1666 = vmatpush1.msra.mxu0 %v725
        %1667 = vmatprep.subr.mxu0 %v729
        %1668 = vmatpush1.msra.mxu0 %v728
        %1669 = vmatprep.subr.mxu0 %v732
        %1670 = vmatpush1.msra.mxu0 %v731
        %1671 = vmatprep.subr.mxu0 %v735
        %1672 = vmatpush1.msra.mxu0 %v734
        %1673 = vmatprep.subr.mxu0 %v738
        %1674 = vmatpush1.msra.mxu0 %v737
        %1675 = vmatprep.subr.mxu0 %v741
        %1676 = vmatpush1.msra.mxu0 %v740
        %1677 = vmatprep.subr.mxu0 %v744
        %1678 = vmatpush1.msra.mxu0 %v743
        %1679 = vmatprep.subr.mxu0 %v747
        %1680 = vmatpush1.msra.mxu0 %v746
        %1681 = vmatprep.subr.mxu0 %v750
        %1682 = vmatpush1.msra.mxu0 %v749
        %1683 = vmatprep.subr.mxu0 %v753
        %1684 = vmatpush1.msra.mxu0 %v752
        %1685 = vmatprep.subr.mxu0 %v756
        %1686 = vmatpush1.msra.mxu0 %v755
        %1687 = vmatprep.subr.mxu0 0.0
        %1688 = vmatpush1.msra.mxu0 0.0
        %1689 = vmatprep.subr.mxu0 0.0
        %1690 = vmatpush1.msra.mxu0 0.0
        %1691 = vmatprep.subr.mxu0 0.0
        %1692 = vmatpush1.msra.mxu0 0.0
        %1693 = vmatprep.subr.mxu0 0.0
        %1694 = vmatpush1.msra.mxu0 0.0
        %1695 = vmatprep.subr.mxu0 0.0
        %1696 = vmatpush1.msra.mxu0 0.0
        %1697 = vmatprep.subr.mxu0 0.0
        %1698 = vmatpush1.msra.mxu0 0.0
        %1699 = vmatprep.subr.mxu0 0.0
        %1700 = vmatpush1.msra.mxu0 0.0
        %1701 = vmatprep.subr.mxu0 0.0
        %1702 = vmatpush1.msra.mxu0 0.0
        %1703 = vmatprep.subr.mxu0 0.0
        %1704 = vmatpush1.msra.mxu0 0.0
        %1705 = vmatprep.subr.mxu0 0.0
        %1706 = vmatpush1.msra.mxu0 0.0
        %1707 = vmatprep.subr.mxu0 0.0
        %1708 = vmatpush1.msra.mxu0 0.0
        %1709 = vmatprep.subr.mxu0 0.0
        %1710 = vmatpush1.msra.mxu0 0.0
        %1711 = vmatprep.subr.mxu0 0.0
        %1712 = vmatpush1.msra.mxu0 0.0
        %1713 = vmatprep.subr.mxu0 0.0
        %1714 = vmatpush1.msra.mxu0 0.0
        %1715 = vmatprep.subr.mxu0 0.0
        %1716 = vmatpush1.msra.mxu0 0.0
        %1717 = vmatprep.subr.mxu0 0.0
        %1718 = vmatpush1.msra.mxu0 0.0
        %1719 = vmatprep.mubr.f32.mxu0 0.0
        %1720 = vmatmul.mubr.f32.gmra.mrb[0].mxu0 %v1641
        %v1721 = vpop.f32.mrb[0].mxu0
        %v1722 = vadd.f32 0.0, %v1721
        %v1723 = vpop.f32.mrb[0].mxu0
        %v1724 = vadd.f32 0.0, %v1723
        %1725 = vdwg.mxu0
        %1726 = vmatprep.subr.mxu0 0.0
        %1727 = vmatpush1.msra.mxu0 %v712
        %1728 = vmatprep.subr.mxu0 0.0
        %1729 = vmatpush1.msra.mxu0 %v715
        %1730 = vmatprep.subr.mxu0 0.0
        %1731 = vmatpush1.msra.mxu0 %v718
        %1732 = vmatprep.subr.mxu0 0.0
        %1733 = vmatpush1.msra.mxu0 %v721
        %1734 = vmatprep.subr.mxu0 0.0
        %1735 = vmatpush1.msra.mxu0 %v724
        %1736 = vmatprep.subr.mxu0 0.0
        %1737 = vmatpush1.msra.mxu0 %v727
        %1738 = vmatprep.subr.mxu0 0.0
        %1739 = vmatpush1.msra.mxu0 %v730
        %1740 = vmatprep.subr.mxu0 0.0
        %1741 = vmatpush1.msra.mxu0 %v733
        %1742 = vmatprep.subr.mxu0 0.0
        %1743 = vmatpush1.msra.mxu0 %v736
        %1744 = vmatprep.subr.mxu0 0.0
        %1745 = vmatpush1.msra.mxu0 %v739
        %1746 = vmatprep.subr.mxu0 0.0
        %1747 = vmatpush1.msra.mxu0 %v742
        %1748 = vmatprep.subr.mxu0 0.0
        %1749 = vmatpush1.msra.mxu0 %v745
        %1750 = vmatprep.subr.mxu0 0.0
        %1751 = vmatpush1.msra.mxu0 %v748
        %1752 = vmatprep.subr.mxu0 0.0
        %1753 = vmatpush1.msra.mxu0 %v751
        %1754 = vmatprep.subr.mxu0 0.0
        %1755 = vmatpush1.msra.mxu0 %v754
        %1756 = vmatprep.subr.mxu0 0.0
        %1757 = vmatpush1.msra.mxu0 %v757
        %1758 = vmatprep.subr.mxu0 0.0
        %1759 = vmatpush1.msra.mxu0 0.0
        %1760 = vmatprep.subr.mxu0 0.0
        %1761 = vmatpush1.msra.mxu0 0.0
        %1762 = vmatprep.subr.mxu0 0.0
        %1763 = vmatpush1.msra.mxu0 0.0
        %1764 = vmatprep.subr.mxu0 0.0
        %1765 = vmatpush1.msra.mxu0 0.0
        %1766 = vmatprep.subr.mxu0 0.0
        %1767 = vmatpush1.msra.mxu0 0.0
        %1768 = vmatprep.subr.mxu0 0.0
        %1769 = vmatpush1.msra.mxu0 0.0
        %1770 = vmatprep.subr.mxu0 0.0
        %1771 = vmatpush1.msra.mxu0 0.0
        %1772 = vmatprep.subr.mxu0 0.0
        %1773 = vmatpush1.msra.mxu0 0.0
        %1774 = vmatprep.subr.mxu0 0.0
        %1775 = vmatpush1.msra.mxu0 0.0
        %1776 = vmatprep.subr.mxu0 0.0
        %1777 = vmatpush1.msra.mxu0 0.0
        %1778 = vmatprep.subr.mxu0 0.0
        %1779 = vmatpush1.msra.mxu0 0.0
        %1780 = vmatprep.subr.mxu0 0.0
        %1781 = vmatpush1.msra.mxu0 0.0
        %1782 = vmatprep.subr.mxu0 0.0
        %1783 = vmatpush1.msra.mxu0 0.0
        %1784 = vmatprep.subr.mxu0 0.0
        %1785 = vmatpush1.msra.mxu0 0.0
        %1786 = vmatprep.subr.mxu0 0.0
        %1787 = vmatpush1.msra.mxu0 0.0
        %1788 = vmatprep.subr.mxu0 0.0
        %1789 = vmatpush1.msra.mxu0 0.0
        %1790 = vmatprep.mubr.f32.mxu0 0.0
        %1791 = vmatmul.mubr.f32.gmra.mrb[0].mxu0 %v1641
        %v1792 = vpop.f32.mrb[0].mxu0
        %v1793 = vadd.f32 0.0, %v1792
        %v1794 = vpop.f32.mrb[0].mxu0
        %1795 = vdwg.mxu0
        %v1796 = vadd.f32 %v1652, %v1722
        %v1797 = vxor.u32 %v1796, 2147483648
        %v1798 = vmul.f32 %v1797, 1.442695
        %v1799 = vpow.pop %v1798
        %v1800 = vadd.f32 %v1799, 1.0
        %v1801 = vrcp.pop %v1800
        %v1802 = vmul.f32 1.0, %v1801
        %v1803 = vadd.f32 %v1653, %v1724
        %v1804 = vxor.u32 %v1803, 2147483648
        %v1805 = vmul.f32 %v1804, 1.442695
        %v1806 = vpow.pop %v1805
        %v1807 = vadd.f32 %v1806, 1.0
        %v1808 = vrcp.pop %v1807
        %v1809 = vmul.f32 1.0, %v1808
        %v1810 = vadd.f32 %v1793, %v763
        %v1811 = vmul.f32 %v1802, %v1810
        %v1812 = vadd.f32 %v1654, %v1811
        %v1813 = vtanh.pop %v1812
        %v1814 = vsub.f32 1.0, %v1809
        %v1815 = vmul.f32 %v1814, %v1813
        %v1816 = vmul.f32 %v1809, %v1641
        %v1817 = vadd.f32 %v1815, %v1816
        %s1818 = scalar_lea.vmem %s371, %s1646 [#allocation9]
        %1819 = vst [vmem:[%s1818] sm:$0xff] %v1817
        %s1820 = smul.u32 %s29, 4294967291
        %s1821 = sadd.s32 %s1820, 6
        %s1822 = smul.u32 %s1821, 8
        %s1823 = sshra.s32 %s1822, 3
        %s1824 = sand.u32 %s1822, 7
        %s1825 = smul.u32 %s1823, 3
        %s1826 = smul.addr %s1825, 8
        %s1827 = scalar_lea.vmem [#allocation3], %s1826
        %v1828 = vld [vmem:[%s1827] sm:$0xff]
        %v1829 = vld [vmem:[%s1827 + $0x8] sm:$0xff]
        %v1830 = vld [vmem:[%s1827 + $0x10] sm:$0xff]
        %1831 = vmatprep.subr.mxu0 %v711
        %1832 = vmatpush1.msra.mxu0 %v710
        %1833 = vmatprep.subr.mxu0 %v714
        %1834 = vmatpush1.msra.mxu0 %v713
        %1835 = vmatprep.subr.mxu0 %v717
        %1836 = vmatpush1.msra.mxu0 %v716
        %1837 = vmatprep.subr.mxu0 %v720
        %1838 = vmatpush1.msra.mxu0 %v719
        %1839 = vmatprep.subr.mxu0 %v723
        %1840 = vmatpush1.msra.mxu0 %v722
        %1841 = vmatprep.subr.mxu0 %v726
        %1842 = vmatpush1.msra.mxu0 %v725
        %1843 = vmatprep.subr.mxu0 %v729
        %1844 = vmatpush1.msra.mxu0 %v728
        %1845 = vmatprep.subr.mxu0 %v732
        %1846 = vmatpush1.msra.mxu0 %v731
        %1847 = vmatprep.subr.mxu0 %v735
        %1848 = vmatpush1.msra.mxu0 %v734
        %1849 = vmatprep.subr.mxu0 %v738
        %1850 = vmatpush1.msra.mxu0 %v737
        %1851 = vmatprep.subr.mxu0 %v741
        %1852 = vmatpush1.msra.mxu0 %v740
        %1853 = vmatprep.subr.mxu0 %v744
        %1854 = vmatpush1.msra.mxu0 %v743
        %1855 = vmatprep.subr.mxu0 %v747
        %1856 = vmatpush1.msra.mxu0 %v746
        %1857 = vmatprep.subr.mxu0 %v750
        %1858 = vmatpush1.msra.mxu0 %v749
        %1859 = vmatprep.subr.mxu0 %v753
        %1860 = vmatpush1.msra.mxu0 %v752
        %1861 = vmatprep.subr.mxu0 %v756
        %1862 = vmatpush1.msra.mxu0 %v755
        %1863 = vmatprep.subr.mxu0 0.0
        %1864 = vmatpush1.msra.mxu0 0.0
        %1865 = vmatprep.subr.mxu0 0.0
        %1866 = vmatpush1.msra.mxu0 0.0
        %1867 = vmatprep.subr.mxu0 0.0
        %1868 = vmatpush1.msra.mxu0 0.0
        %1869 = vmatprep.subr.mxu0 0.0
        %1870 = vmatpush1.msra.mxu0 0.0
        %1871 = vmatprep.subr.mxu0 0.0
        %1872 = vmatpush1.msra.mxu0 0.0
        %1873 = vmatprep.subr.mxu0 0.0
        %1874 = vmatpush1.msra.mxu0 0.0
        %1875 = vmatprep.subr.mxu0 0.0
        %1876 = vmatpush1.msra.mxu0 0.0
        %1877 = vmatprep.subr.mxu0 0.0
        %1878 = vmatpush1.msra.mxu0 0.0
        %1879 = vmatprep.subr.mxu0 0.0
        %1880 = vmatpush1.msra.mxu0 0.0
        %1881 = vmatprep.subr.mxu0 0.0
        %1882 = vmatpush1.msra.mxu0 0.0
        %1883 = vmatprep.subr.mxu0 0.0
        %1884 = vmatpush1.msra.mxu0 0.0
        %1885 = vmatprep.subr.mxu0 0.0
        %1886 = vmatpush1.msra.mxu0 0.0
        %1887 = vmatprep.subr.mxu0 0.0
        %1888 = vmatpush1.msra.mxu0 0.0
        %1889 = vmatprep.subr.mxu0 0.0
        %1890 = vmatpush1.msra.mxu0 0.0
        %1891 = vmatprep.subr.mxu0 0.0
        %1892 = vmatpush1.msra.mxu0 0.0
        %1893 = vmatprep.subr.mxu0 0.0
        %1894 = vmatpush1.msra.mxu0 0.0
        %1895 = vmatprep.mubr.f32.mxu0 0.0
        %1896 = vmatmul.mubr.f32.gmra.mrb[0].mxu0 %v1817
        %v1897 = vpop.f32.mrb[0].mxu0
        %v1898 = vadd.f32 0.0, %v1897
        %v1899 = vpop.f32.mrb[0].mxu0
        %v1900 = vadd.f32 0.0, %v1899
        %1901 = vdwg.mxu0
        %1902 = vmatprep.subr.mxu0 0.0
        %1903 = vmatpush1.msra.mxu0 %v712
        %1904 = vmatprep.subr.mxu0 0.0
        %1905 = vmatpush1.msra.mxu0 %v715
        %1906 = vmatprep.subr.mxu0 0.0
        %1907 = vmatpush1.msra.mxu0 %v718
        %1908 = vmatprep.subr.mxu0 0.0
        %1909 = vmatpush1.msra.mxu0 %v721
        %1910 = vmatprep.subr.mxu0 0.0
        %1911 = vmatpush1.msra.mxu0 %v724
        %1912 = vmatprep.subr.mxu0 0.0
        %1913 = vmatpush1.msra.mxu0 %v727
        %1914 = vmatprep.subr.mxu0 0.0
        %1915 = vmatpush1.msra.mxu0 %v730
        %1916 = vmatprep.subr.mxu0 0.0
        %1917 = vmatpush1.msra.mxu0 %v733
        %1918 = vmatprep.subr.mxu0 0.0
        %1919 = vmatpush1.msra.mxu0 %v736
        %1920 = vmatprep.subr.mxu0 0.0
        %1921 = vmatpush1.msra.mxu0 %v739
        %1922 = vmatprep.subr.mxu0 0.0
        %1923 = vmatpush1.msra.mxu0 %v742
        %1924 = vmatprep.subr.mxu0 0.0
        %1925 = vmatpush1.msra.mxu0 %v745
        %1926 = vmatprep.subr.mxu0 0.0
        %1927 = vmatpush1.msra.mxu0 %v748
        %1928 = vmatprep.subr.mxu0 0.0
        %1929 = vmatpush1.msra.mxu0 %v751
        %1930 = vmatprep.subr.mxu0 0.0
        %1931 = vmatpush1.msra.mxu0 %v754
        %1932 = vmatprep.subr.mxu0 0.0
        %1933 = vmatpush1.msra.mxu0 %v757
        %1934 = vmatprep.subr.mxu0 0.0
        %1935 = vmatpush1.msra.mxu0 0.0
        %1936 = vmatprep.subr.mxu0 0.0
        %1937 = vmatpush1.msra.mxu0 0.0
        %1938 = vmatprep.subr.mxu0 0.0
        %1939 = vmatpush1.msra.mxu0 0.0
        %1940 = vmatprep.subr.mxu0 0.0
        %1941 = vmatpush1.msra.mxu0 0.0
        %1942 = vmatprep.subr.mxu0 0.0
        %1943 = vmatpush1.msra.mxu0 0.0
        %1944 = vmatprep.subr.mxu0 0.0
        %1945 = vmatpush1.msra.mxu0 0.0
        %1946 = vmatprep.subr.mxu0 0.0
        %1947 = vmatpush1.msra.mxu0 0.0
        %1948 = vmatprep.subr.mxu0 0.0
        %1949 = vmatpush1.msra.mxu0 0.0
        %1950 = vmatprep.subr.mxu0 0.0
        %1951 = vmatpush1.msra.mxu0 0.0
        %1952 = vmatprep.subr.mxu0 0.0
        %1953 = vmatpush1.msra.mxu0 0.0
        %1954 = vmatprep.subr.mxu0 0.0
        %1955 = vmatpush1.msra.mxu0 0.0
        %1956 = vmatprep.subr.mxu0 0.0
        %1957 = vmatpush1.msra.mxu0 0.0
        %1958 = vmatprep.subr.mxu0 0.0
        %1959 = vmatpush1.msra.mxu0 0.0
        %1960 = vmatprep.subr.mxu0 0.0
        %1961 = vmatpush1.msra.mxu0 0.0
        %1962 = vmatprep.subr.mxu0 0.0
        %1963 = vmatpush1.msra.mxu0 0.0
        %1964 = vmatprep.subr.mxu0 0.0
        %1965 = vmatpush1.msra.mxu0 0.0
        %1966 = vmatprep.mubr.f32.mxu0 0.0
        %1967 = vmatmul.mubr.f32.gmra.mrb[0].mxu0 %v1817
        %v1968 = vpop.f32.mrb[0].mxu0
        %v1969 = vadd.f32 0.0, %v1968
        %v1970 = vpop.f32.mrb[0].mxu0
        %1971 = vdwg.mxu0
        %v1972 = vadd.f32 %v1828, %v1898
        %v1973 = vxor.u32 %v1972, 2147483648
        %v1974 = vmul.f32 %v1973, 1.442695
        %v1975 = vpow.pop %v1974
        %v1976 = vadd.f32 %v1975, 1.0
        %v1977 = vrcp.pop %v1976
        %v1978 = vmul.f32 1.0, %v1977
        %v1979 = vadd.f32 %v1829, %v1900
        %v1980 = vxor.u32 %v1979, 2147483648
        %v1981 = vmul.f32 %v1980, 1.442695
        %v1982 = vpow.pop %v1981
        %v1983 = vadd.f32 %v1982, 1.0
        %v1984 = vrcp.pop %v1983
        %v1985 = vmul.f32 1.0, %v1984
        %v1986 = vadd.f32 %v1969, %v763
        %v1987 = vmul.f32 %v1978, %v1986
        %v1988 = vadd.f32 %v1830, %v1987
        %v1989 = vtanh.pop %v1988
        %v1990 = vsub.f32 1.0, %v1985
        %v1991 = vmul.f32 %v1990, %v1989
        %v1992 = vmul.f32 %v1985, %v1817
        %v1993 = vadd.f32 %v1991, %v1992
        %s1994 = scalar_lea.vmem %s371, %s1822 [#allocation9]
        %1995 = vst [vmem:[%s1994] sm:$0xff] %v1993
        %s1996 = smul.u32 %s29, 4294967289
        %s1997 = sadd.s32 %s1996, 7
        %s1998 = smul.u32 %s1997, 8
        %s1999 = sshra.s32 %s1998, 3
        %s2000 = sand.u32 %s1998, 7
        %s2001 = smul.u32 %s1999, 3
        %s2002 = smul.addr %s2001, 8
        %s2003 = scalar_lea.vmem [#allocation3], %s2002
        %v2004 = vld [vmem:[%s2003] sm:$0xff]
        %v2005 = vld [vmem:[%s2003 + $0x8] sm:$0xff]
        %v2006 = vld [vmem:[%s2003 + $0x10] sm:$0xff]
        %2007 = vmatprep.subr.mxu0 %v711
        %2008 = vmatpush1.msra.mxu0 %v710
        %2009 = vmatprep.subr.mxu0 %v714
        %2010 = vmatpush1.msra.mxu0 %v713
        %2011 = vmatprep.subr.mxu0 %v717
        %2012 = vmatpush1.msra.mxu0 %v716
        %2013 = vmatprep.subr.mxu0 %v720
        %2014 = vmatpush1.msra.mxu0 %v719
        %2015 = vmatprep.subr.mxu0 %v723
        %2016 = vmatpush1.msra.mxu0 %v722
        %2017 = vmatprep.subr.mxu0 %v726
        %2018 = vmatpush1.msra.mxu0 %v725
        %2019 = vmatprep.subr.mxu0 %v729
        %2020 = vmatpush1.msra.mxu0 %v728
        %2021 = vmatprep.subr.mxu0 %v732
        %2022 = vmatpush1.msra.mxu0 %v731
        %2023 = vmatprep.subr.mxu0 %v735
        %2024 = vmatpush1.msra.mxu0 %v734
        %2025 = vmatprep.subr.mxu0 %v738
        %2026 = vmatpush1.msra.mxu0 %v737
        %2027 = vmatprep.subr.mxu0 %v741
        %2028 = vmatpush1.msra.mxu0 %v740
        %2029 = vmatprep.subr.mxu0 %v744
        %2030 = vmatpush1.msra.mxu0 %v743
        %2031 = vmatprep.subr.mxu0 %v747
        %2032 = vmatpush1.msra.mxu0 %v746
        %2033 = vmatprep.subr.mxu0 %v750
        %2034 = vmatpush1.msra.mxu0 %v749
        %2035 = vmatprep.subr.mxu0 %v753
        %2036 = vmatpush1.msra.mxu0 %v752
        %2037 = vmatprep.subr.mxu0 %v756
        %2038 = vmatpush1.msra.mxu0 %v755
        %2039 = vmatprep.subr.mxu0 0.0
        %2040 = vmatpush1.msra.mxu0 0.0
        %2041 = vmatprep.subr.mxu0 0.0
        %2042 = vmatpush1.msra.mxu0 0.0
        %2043 = vmatprep.subr.mxu0 0.0
        %2044 = vmatpush1.msra.mxu0 0.0
        %2045 = vmatprep.subr.mxu0 0.0
        %2046 = vmatpush1.msra.mxu0 0.0
        %2047 = vmatprep.subr.mxu0 0.0
        %2048 = vmatpush1.msra.mxu0 0.0
        %2049 = vmatprep.subr.mxu0 0.0
        %2050 = vmatpush1.msra.mxu0 0.0
        %2051 = vmatprep.subr.mxu0 0.0
        %2052 = vmatpush1.msra.mxu0 0.0
        %2053 = vmatprep.subr.mxu0 0.0
        %2054 = vmatpush1.msra.mxu0 0.0
        %2055 = vmatprep.subr.mxu0 0.0
        %2056 = vmatpush1.msra.mxu0 0.0
        %2057 = vmatprep.subr.mxu0 0.0
        %2058 = vmatpush1.msra.mxu0 0.0
        %2059 = vmatprep.subr.mxu0 0.0
        %2060 = vmatpush1.msra.mxu0 0.0
        %2061 = vmatprep.subr.mxu0 0.0
        %2062 = vmatpush1.msra.mxu0 0.0
        %2063 = vmatprep.subr.mxu0 0.0
        %2064 = vmatpush1.msra.mxu0 0.0
        %2065 = vmatprep.subr.mxu0 0.0
        %2066 = vmatpush1.msra.mxu0 0.0
        %2067 = vmatprep.subr.mxu0 0.0
        %2068 = vmatpush1.msra.mxu0 0.0
        %2069 = vmatprep.subr.mxu0 0.0
        %2070 = vmatpush1.msra.mxu0 0.0
        %2071 = vmatprep.mubr.f32.mxu0 0.0
        %2072 = vmatmul.mubr.f32.gmra.mrb[0].mxu0 %v1993
        %v2073 = vpop.f32.mrb[0].mxu0
        %v2074 = vadd.f32 0.0, %v2073
        %v2075 = vpop.f32.mrb[0].mxu0
        %v2076 = vadd.f32 0.0, %v2075
        %2077 = vdwg.mxu0
        %2078 = vmatprep.subr.mxu0 0.0
        %2079 = vmatpush1.msra.mxu0 %v712
        %2080 = vmatprep.subr.mxu0 0.0
        %2081 = vmatpush1.msra.mxu0 %v715
        %2082 = vmatprep.subr.mxu0 0.0
        %2083 = vmatpush1.msra.mxu0 %v718
        %2084 = vmatprep.subr.mxu0 0.0
        %2085 = vmatpush1.msra.mxu0 %v721
        %2086 = vmatprep.subr.mxu0 0.0
        %2087 = vmatpush1.msra.mxu0 %v724
        %2088 = vmatprep.subr.mxu0 0.0
        %2089 = vmatpush1.msra.mxu0 %v727
        %2090 = vmatprep.subr.mxu0 0.0
        %2091 = vmatpush1.msra.mxu0 %v730
        %2092 = vmatprep.subr.mxu0 0.0
        %2093 = vmatpush1.msra.mxu0 %v733
        %2094 = vmatprep.subr.mxu0 0.0
        %2095 = vmatpush1.msra.mxu0 %v736
        %2096 = vmatprep.subr.mxu0 0.0
        %2097 = vmatpush1.msra.mxu0 %v739
        %2098 = vmatprep.subr.mxu0 0.0
        %2099 = vmatpush1.msra.mxu0 %v742
        %2100 = vmatprep.subr.mxu0 0.0
        %2101 = vmatpush1.msra.mxu0 %v745
        %2102 = vmatprep.subr.mxu0 0.0
        %2103 = vmatpush1.msra.mxu0 %v748
        %2104 = vmatprep.subr.mxu0 0.0
        %2105 = vmatpush1.msra.mxu0 %v751
        %2106 = vmatprep.subr.mxu0 0.0
        %2107 = vmatpush1.msra.mxu0 %v754
        %2108 = vmatprep.subr.mxu0 0.0
        %2109 = vmatpush1.msra.mxu0 %v757
        %2110 = vmatprep.subr.mxu0 0.0
        %2111 = vmatpush1.msra.mxu0 0.0
        %2112 = vmatprep.subr.mxu0 0.0
        %2113 = vmatpush1.msra.mxu0 0.0
        %2114 = vmatprep.subr.mxu0 0.0
        %2115 = vmatpush1.msra.mxu0 0.0
        %2116 = vmatprep.subr.mxu0 0.0
        %2117 = vmatpush1.msra.mxu0 0.0
        %2118 = vmatprep.subr.mxu0 0.0
        %2119 = vmatpush1.msra.mxu0 0.0
        %2120 = vmatprep.subr.mxu0 0.0
        %2121 = vmatpush1.msra.mxu0 0.0
        %2122 = vmatprep.subr.mxu0 0.0
        %2123 = vmatpush1.msra.mxu0 0.0
        %2124 = vmatprep.subr.mxu0 0.0
        %2125 = vmatpush1.msra.mxu0 0.0
        %2126 = vmatprep.subr.mxu0 0.0
        %2127 = vmatpush1.msra.mxu0 0.0
        %2128 = vmatprep.subr.mxu0 0.0
        %2129 = vmatpush1.msra.mxu0 0.0
        %2130 = vmatprep.subr.mxu0 0.0
        %2131 = vmatpush1.msra.mxu0 0.0
        %2132 = vmatprep.subr.mxu0 0.0
        %2133 = vmatpush1.msra.mxu0 0.0
        %2134 = vmatprep.subr.mxu0 0.0
        %2135 = vmatpush1.msra.mxu0 0.0
        %2136 = vmatprep.subr.mxu0 0.0
        %2137 = vmatpush1.msra.mxu0 0.0
        %2138 = vmatprep.subr.mxu0 0.0
        %2139 = vmatpush1.msra.mxu0 0.0
        %2140 = vmatprep.subr.mxu0 0.0
        %2141 = vmatpush1.msra.mxu0 0.0
        %2142 = vmatprep.mubr.f32.mxu0 0.0
        %2143 = vmatmul.mubr.f32.gmra.mrb[0].mxu0 %v1993
        %v2144 = vpop.f32.mrb[0].mxu0
        %v2145 = vadd.f32 0.0, %v2144
        %v2146 = vpop.f32.mrb[0].mxu0
        %2147 = vdwg.mxu0
        %v2148 = vadd.f32 %v2004, %v2074
        %v2149 = vxor.u32 %v2148, 2147483648
        %v2150 = vmul.f32 %v2149, 1.442695
        %v2151 = vpow.pop %v2150
        %v2152 = vadd.f32 %v2151, 1.0
        %v2153 = vrcp.pop %v2152
        %v2154 = vmul.f32 1.0, %v2153
        %v2155 = vadd.f32 %v2005, %v2076
        %v2156 = vxor.u32 %v2155, 2147483648
        %v2157 = vmul.f32 %v2156, 1.442695
        %v2158 = vpow.pop %v2157
        %v2159 = vadd.f32 %v2158, 1.0
        %v2160 = vrcp.pop %v2159
        %v2161 = vmul.f32 1.0, %v2160
        %v2162 = vadd.f32 %v2145, %v763
        %v2163 = vmul.f32 %v2154, %v2162
        %v2164 = vadd.f32 %v2006, %v2163
        %v2165 = vtanh.pop %v2164
        %v2166 = vsub.f32 1.0, %v2161
        %v2167 = vmul.f32 %v2166, %v2165
        %v2168 = vmul.f32 %v2161, %v1993
        %v2169 = vadd.f32 %v2167, %v2168
        %s2170 = scalar_lea.vmem %s371, %s1998 [#allocation9]
        %2171 = vst [vmem:[%s2170] sm:$0xff] %v2169
        %2172 = vst [vmem:[#allocation2] sm:$0xff] %v2169
        %s2173 = sand.u32 %s197, 1
        %s2174 = scalar_lea.sflag [#allocation6], %s2173
        %s2175 = sand.u32 %s197, 1
        %s2176 = smul.addr %s2175, 64
        %s2177 = scalar_lea.vmem [#allocation9], %s2176
        // Predicated region
        $region53: #{tpu_custom_call.1} parent=39 // pred_check
          %p2178 = pneg %p207
        $region54: #{tpu_custom_call.1} parent=39 // pred_check_branch
          %2180 = sbr.rel (%p2178) target = $region56
        $region55: #{tpu_custom_call.1} parent=39 // pred_region
          %s2181 = ssub.s32 1, %s29
          %s2182 = smul.u32 %s30, %s2181
          %s2183 = ssub.s32 0, %s30
          %s2184 = smul.u32 %s2183, %s29
          %s2185 = sadd.s32 %s2182, %s2184
          %s2186 = smul.u32 8, %s2185
          %s2188 = ssub.s32 1024, 1024
          %2189 = vsyncadd %s2174, %s2188
          %s2190 = smul.addr %s2186, 2
          %s2191 = sadd.s32 %s29, %s2190
          %s2192 = smul.addr %s2191, 128
          %s2193 = scalar_lea.hbm %s5, %s2192
          %s2194 = sshll.u32 %s2177, 4
          %s2195 = int_to_ptr.vmem [resolvable:$true] %s2194
          %2200 = dma.vmem_to_hbm [thread:$0]  %s2195, 1024, %s2193, %s2174, 128, 256, 8
        $region56: #{tpu_custom_call.1} parent=39 // pred_fallthru
          _
      $region40: #{tpu_custom_call.1} parent=5 // pred_fallthru
        _
      %p2201 = scmp.le.s32.totalorder 2, %s20
      // Predicated region
      $region57: #{tpu_custom_call.1} parent=5 // pred_check
        %p2202 = pneg %p2201
      $region58: #{tpu_custom_call.1} parent=5 // pred_check_branch
        %2204 = sbr.rel (%p2202) target = $region60
      $region59: #{tpu_custom_call.1} parent=5 // pred_region
        %s2205 = ssub.s32 %s20, 2
        // Predicated region
        $region61: #{tpu_custom_call.1} parent=59 // pred_check
          %p2206 = pneg %p213
        $region62: #{tpu_custom_call.1} parent=59 // pred_check_branch
          %2208 = sbr.rel (%p2206) target = $region64
        $region63: #{tpu_custom_call.1} parent=59 // pred_region
          %s2209 = sand.u32 %s198, 1
          %s2210 = scalar_lea.sflag [#allocation6], %s2209
          %s2211 = sand.u32 %s198, 1
          %s2212 = smul.addr %s2211, 64
          %s2213 = scalar_lea.vmem [#allocation9], %s2212
          %2214 = dma.done %s2210, 1024
        $region64: #{tpu_custom_call.1} parent=59 // pred_fallthru
          _
      $region60: #{tpu_custom_call.1} parent=5 // pred_fallthru
        _
    $region6: #{tpu_custom_call.1} parent=1 // loop_footer
      %s24 = sadd.s32 1, %s20
    $region7: #{tpu_custom_call.1} parent=1 // loop_footer_branch
      %19 = sbr.rel target = $region3
    $region8: #{tpu_custom_call.1} parent=1 // loop_exit
      _
    %2215 = vsyncpa [#allocation5], 1
    %s2216 = scalar_lea.sflag [#allocation5], 1
    %2217 = vsyncpa %s2216, 1
    %2218 = vsyncpa [#allocation8], 1
    %s2219 = scalar_lea.sflag [#allocation8], 1
    %2220 = vsyncpa %s2219, 1
    %2221 = vsyncpa [#allocation6], 1
    %s2222 = scalar_lea.sflag [#allocation6], 1
    %2223 = vsyncpa %s2222, 1

</llo_original>
